<compile_context>
chip_gen: v7x
topology: tpu7x:2x2x1
jax: 0.10.0
libtpu: 0.0.40
codegen_flags: <defaults>
</compile_context>

<pallas_src>
import functools

import jax
import jax.numpy as jnp
import numpy as np
from jax.experimental import pallas as pl
from jax.experimental.pallas import tpu as pltpu


# ---------------------------------------------------------------------------
# helpers
# ---------------------------------------------------------------------------
def _round_up(x, m):
    return ((x + m - 1) // m) * m


def _pad2(a, rows, cols):
    r, c = a.shape
    return jnp.pad(a, ((0, rows - r), (0, cols - c)))


def _dim_tile(dim, cap=512):
    """Pick a 128-multiple tile (<= cap) and the padded extent it divides."""
    padded = _round_up(dim, 128)
    if padded <= cap:
        return padded, padded
    return cap, _round_up(dim, cap)


# ---------------------------------------------------------------------------
# Pallas kernel: tiled matmul with optional fused bias / relu / log_softmax
# ---------------------------------------------------------------------------
def _gcn_matmul_kernel(*refs, epilogue, nclass, has_bias):
    if has_bias:
        a_ref, b_ref, bias_ref, o_ref, acc_ref = refs
    else:
        a_ref, b_ref, o_ref, acc_ref = refs
        bias_ref = None

    k = pl.program_id(2)

    @pl.when(k == 0)
    def _init():
        acc_ref[...] = jnp.zeros_like(acc_ref)

    acc_ref[...] += jnp.dot(
        a_ref[...], b_ref[...], preferred_element_type=jnp.float32
    )

    @pl.when(k == pl.num_programs(2) - 1)
    def _finalize():
        z = acc_ref[...]
        if bias_ref is not None:
            z = z + bias_ref[...].astype(jnp.float32)
        if epilogue == "relu":
            z = jnp.maximum(z, 0.0)
        elif epilogue == "log_softmax":
            # Padded class lanes must not win the max nor enter the sum.
            lane = jax.lax.broadcasted_iota(jnp.int32, z.shape, 1)
            valid = lane < nclass
            zm = jnp.where(valid, z, jnp.float32(-1e30))
            m = jnp.max(zm, axis=-1, keepdims=True)
            e = jnp.where(valid, jnp.exp(zm - m), 0.0)
            s = jnp.sum(e, axis=-1, keepdims=True)
            z = zm - m - jnp.log(s)
        o_ref[...] = z.astype(o_ref.dtype)


def _pallas_matmul(a, b, bias=None, *, tm, tn, tk, epilogue="none", nclass=0,
                   out_dtype=jnp.bfloat16, vmem_limit=48 * 1024 * 1024):
    """C = epilogue(A @ B [+ bias]).  All operands pre-padded / tile-divisible."""
    M, K = a.shape
    K2, N = b.shape
    assert K == K2 and M % tm == 0 and N % tn == 0 and K % tk == 0

    grid = (M // tm, N // tn, K // tk)

    in_specs = [
        pl.BlockSpec((tm, tk), lambda i, j, k: (i, k)),
        pl.BlockSpec((tk, tn), lambda i, j, k: (k, j)),
    ]
    inputs = [a, b]
    if bias is not None:
        in_specs.append(pl.BlockSpec((1, tn), lambda i, j, k: (0, j)))
        inputs.append(bias)

    kernel = functools.partial(
        _gcn_matmul_kernel,
        epilogue=epilogue,
        nclass=nclass,
        has_bias=bias is not None,
    )

    return pl.pallas_call(
        kernel,
        out_shape=jax.ShapeDtypeStruct((M, N), out_dtype),
        grid_spec=pltpu.PrefetchScalarGridSpec(
            num_scalar_prefetch=0,
            grid=grid,
            in_specs=in_specs,
            out_specs=pl.BlockSpec((tm, tn), lambda i, j, k: (i, j)),
            scratch_shapes=[pltpu.VMEM((tm, tn), jnp.float32)],
        ),
        compiler_params=pltpu.CompilerParams(
            dimension_semantics=("parallel", "parallel", "arbitrary"),
            vmem_limit_bytes=vmem_limit,
        ),
    )(*inputs)


# ---------------------------------------------------------------------------
# Graph normalization (JAX glue, matches PyG gcn_norm with self-loops)
# ---------------------------------------------------------------------------
def build_normalized_adjacency(edge_index, num_nodes, edge_weight=None):
    src = edge_index[0]
    dst = edge_index[1]
    w = jnp.ones(src.shape[0], jnp.float32) if edge_weight is None else edge_weight
    a = jnp.zeros((num_nodes, num_nodes), jnp.float32).at[dst, src].add(w)
    a = a + jnp.eye(num_nodes, dtype=jnp.float32)           # add self loops
    deg = jnp.sum(a, axis=1)
    d_inv_sqrt = jnp.where(deg > 0, jax.lax.rsqrt(deg), 0.0)
    return a * d_inv_sqrt[:, None] * d_inv_sqrt[None, :]


# ---------------------------------------------------------------------------
# Full forward pass (eval mode: dropout is identity, no LayerNorm)
# ---------------------------------------------------------------------------
# TODO(synk): for genuinely sparse graphs, replace the dense A_hat aggregation
# with a scalar-prefetch CSR row-gather kernel (PrefetchScalarGridSpec) instead
# of the dense N x N matmul.
@functools.partial(jax.jit, static_argnames=())
def gcn_forward_pallas(x, a_hat, w1, b1, w2, b2):
    n_nodes, nfeat = x.shape
    nhid = w1.shape[1]
    nclass = w2.shape[1]

    # ---- tile / padding choices -------------------------------------------
    # node dim tile (rows of every matmul + K of the aggregation matmuls)
    t_node = 256 if _round_up(n_nodes, 128) >= 256 else 128
    n_pad = _round_up(n_nodes, t_node)
    t_f, f_pad = _dim_tile(nfeat)      # reduction dim of X @ W1
    t_h, h_pad = _dim_tile(nhid)       # hidden dim (out of layer-1, K of layer-2)
    c_pad = _round_up(nclass, 128)     # lane-dense class dim (single j block)

    bf16, f32 = jnp.bfloat16, jnp.float32

    # ---- pad operands (bf16 MXU inputs, f32 biases) ------------------------
    a_p = _pad2(a_hat.astype(bf16), n_pad, n_pad)
    x_p = _pad2(x.astype(bf16), n_pad, f_pad)
    w1_p = _pad2(w1.astype(bf16), f_pad, h_pad)
    w2_p = _pad2(w2.astype(bf16), h_pad, c_pad)
    b1_p = _pad2(b1.reshape(1, -1).astype(f32), 1, h_pad)
    b2_p = _pad2(b2.reshape(1, -1).astype(f32), 1, c_pad)

    # ---- layer 1: transform then aggregate, fused bias + relu --------------
    xw = _pallas_matmul(x_p, w1_p, tm=t_node, tn=t_h, tk=t_f, out_dtype=bf16)
    h = _pallas_matmul(a_p, xw, b1_p, tm=t_node, tn=t_h, tk=t_node,
                       epilogue="relu", out_dtype=bf16)

    # ---- layer 2: transform then aggregate, fused bias + log_softmax -------
    hw = _pallas_matmul(h, w2_p, tm=t_node, tn=c_pad, tk=t_h, out_dtype=bf16)
    z = _pallas_matmul(a_p, hw, b2_p, tm=t_node, tn=c_pad, tk=t_node,
                       epilogue="log_softmax", nclass=nclass, out_dtype=f32)

    return z[:n_nodes, :nclass]


# Pure-JAX reference (f32) for correctness checking.
def gcn_reference(x, a_hat, w1, b1, w2, b2):
    h = jnp.maximum(a_hat @ (x @ w1) + b1, 0.0)
    z = a_hat @ (h @ w2) + b2
    return jax.nn.log_softmax(z, axis=1)


# ---------------------------------------------------------------------------
# demo / smoke test
# ---------------------------------------------------------------------------
if __name__ == "__main__":
    key = jax.random.PRNGKey(0)
    n_nodes, nfeat, nhid, nclass = 80, 96, 32, 7
    n_edges = 320

    k1, k2, k3, k4, k5, k6, k7 = jax.random.split(key, 7)

    x = jax.random.normal(k1, (n_nodes, nfeat), dtype=jnp.float32)

    src = jax.random.randint(k2, (n_edges,), 0, n_nodes)
    dst = jax.random.randint(k3, (n_edges,), 0, n_nodes)
    # symmetric (undirected) edge list, as PyG GCNs typically assume
    edge_index = jnp.stack(
        [jnp.concatenate([src, dst]), jnp.concatenate([dst, src])], axis=0
    )

    w1 = jax.random.normal(k4, (nfeat, nhid), dtype=jnp.float32) / np.sqrt(nfeat)
    b1 = 0.1 * jax.random.normal(k5, (nhid,), dtype=jnp.float32)
    w2 = jax.random.normal(k6, (nhid, nclass), dtype=jnp.float32) / np.sqrt(nhid)
    b2 = 0.1 * jax.random.normal(k7, (nclass,), dtype=jnp.float32)

    a_hat = build_normalized_adjacency(edge_index, n_nodes)

    out = gcn_forward_pallas(x, a_hat, w1, b1, w2, b2)
    out = jax.block_until_ready(out)

    ref = jax.block_until_ready(gcn_reference(x, a_hat, w1, b1, w2, b2))

    if not np.allclose(np.asarray(out), np.asarray(ref), atol=1e-1, rtol=1e-1):
        max_err = float(np.max(np.abs(np.asarray(out) - np.asarray(ref))))
        raise AssertionError(f"Pallas GCN mismatch vs reference, max_err={max_err}")

    print("KERNEL_OK")
</pallas_src>

<mosaic_0001>
module attributes {stable_mosaic.version = 11 : i64} {
  func.func @_gcn_matmul_kernel(%arg0: i32, %arg1: i32, %arg2: i32, %arg3: memref<128x128xbf16, #tpu.memory_space<vmem>>, %arg4: memref<128x128xbf16, #tpu.memory_space<vmem>>, %arg5: memref<1x128xf32, #tpu.memory_space<vmem>>, %arg6: memref<128x128xbf16, #tpu.memory_space<vmem>>, %arg7: memref<128x128xf32, #tpu.memory_space<vmem>>) attributes {dimension_semantics = [#tpu.dimension_semantics<parallel>, #tpu.dimension_semantics<parallel>, #tpu.dimension_semantics<arbitrary>], iteration_bounds = array<i64: 1, 1, 1>, scalar_prefetch = 0 : i64, scratch_operands = 1 : i64, tpu.core_type = #tpu.core_type<tc>, window_params = [{transform_indices = @transform_0, window_bounds = array<i64: 128, 128>}, {transform_indices = @transform_1, window_bounds = array<i64: 128, 128>}, {transform_indices = @transform_2, window_bounds = array<i64: 1, 128>}, {transform_indices = @transform_3, window_bounds = array<i64: 128, 128>}]} {
    %c0_i32 = arith.constant 0 : i32
    %0 = arith.cmpi eq, %arg2, %c0_i32 : i32
    %1 = arith.extui %0 : i1 to i32
    %c0_i32_0 = arith.constant 0 : i32
    %2 = arith.cmpi ne, %1, %c0_i32_0 : i32
    scf.if %2 {
      %cst_10 = arith.constant 0.000000e+00 : f32
      %12 = vector.broadcast %cst_10 : f32 to vector<128x128xf32>
      %c0_11 = arith.constant 0 : index
      %c0_12 = arith.constant 0 : index
      %13 = vector.load %arg7[%c0_11, %c0_12] : memref<128x128xf32, #tpu.memory_space<vmem>>, vector<128x128xf32>
      tpu.vector_store %arg7[%c0_11, %c0_12], %12 {strides = array<i32>} : memref<128x128xf32, #tpu.memory_space<vmem>>, vector<128x128xf32>,
    } else {
    }
    %c0 = arith.constant 0 : index
    %c0_1 = arith.constant 0 : index
    %3 = vector.load %arg7[%c0, %c0_1] : memref<128x128xf32, #tpu.memory_space<vmem>>, vector<128x128xf32>
    %c0_2 = arith.constant 0 : index
    %c0_3 = arith.constant 0 : index
    %4 = vector.load %arg3[%c0_2, %c0_3] : memref<128x128xbf16, #tpu.memory_space<vmem>>, vector<128x128xbf16>
    %c0_4 = arith.constant 0 : index
    %c0_5 = arith.constant 0 : index
    %5 = vector.load %arg4[%c0_4, %c0_5] : memref<128x128xbf16, #tpu.memory_space<vmem>>, vector<128x128xbf16>
    %cst = arith.constant dense<0.000000e+00> : vector<128x128xf32>
    %6 = tpu.matmul %4, %5, %cst {dimension_numbers = #tpu.dot_dimension_numbers<[1], [0], [0], [1], [0, 0, 1, 1], [], []>} : vector<128x128xbf16>, vector<128x128xbf16>, vector<128x128xf32> -> vector<128x128xf32>
    %7 = arith.addf %3, %6 : vector<128x128xf32>
    %c0_6 = arith.constant 0 : index
    %c0_7 = arith.constant 0 : index
    %8 = vector.load %arg7[%c0_6, %c0_7] : memref<128x128xf32, #tpu.memory_space<vmem>>, vector<128x128xf32>
    tpu.vector_store %arg7[%c0_6, %c0_7], %7 {strides = array<i32>} : memref<128x128xf32, #tpu.memory_space<vmem>>, vector<128x128xf32>,
    %c0_i32_8 = arith.constant 0 : i32
    %9 = arith.cmpi eq, %arg2, %c0_i32_8 : i32
    %10 = arith.extui %9 : i1 to i32
    %c0_i32_9 = arith.constant 0 : i32
    %11 = arith.cmpi ne, %10, %c0_i32_9 : i32
    scf.if %11 {
      %c0_10 = arith.constant 0 : index
      %c0_11 = arith.constant 0 : index
      %12 = vector.load %arg7[%c0_10, %c0_11] : memref<128x128xf32, #tpu.memory_space<vmem>>, vector<128x128xf32>
      %c0_12 = arith.constant 0 : index
      %c0_13 = arith.constant 0 : index
      %13 = vector.load %arg5[%c0_12, %c0_13] : memref<1x128xf32, #tpu.memory_space<vmem>>, vector<1x128xf32>
      %14 = vector.broadcast %13 : vector<1x128xf32> to vector<128x128xf32>
      %15 = arith.addf %12, %14 : vector<128x128xf32>
      %cst_14 = arith.constant 0.000000e+00 : f32
      %16 = vector.broadcast %cst_14 : f32 to vector<128x128xf32>
      %17 = arith.maximumf %15, %16 : vector<128x128xf32>
      %18 = arith.truncf %17 : vector<128x128xf32> to vector<128x128xbf16>
      %c0_15 = arith.constant 0 : index
      %c0_16 = arith.constant 0 : index
      %19 = vector.load %arg6[%c0_15, %c0_16] : memref<128x128xbf16, #tpu.memory_space<vmem>>, vector<128x128xbf16>
      tpu.vector_store %arg6[%c0_15, %c0_16], %18 {strides = array<i32>} : memref<128x128xbf16, #tpu.memory_space<vmem>>, vector<128x128xbf16>,
    } else {
    }
    return
  }
  func.func @transform_0(%arg0: i32, %arg1: i32, %arg2: i32) -> (i32, i32) {
    %c0_i32 = arith.constant 0 : i32
    return %arg0, %arg2 : i32, i32
  }
  func.func @transform_1(%arg0: i32, %arg1: i32, %arg2: i32) -> (i32, i32) {
    %c0_i32 = arith.constant 0 : i32
    return %arg2, %arg1 : i32, i32
  }
  func.func @transform_2(%arg0: i32, %arg1: i32, %arg2: i32) -> (i32, i32) {
    %c0_i32 = arith.constant 0 : i32
    %c0_i32_0 = arith.constant 0 : i32
    return %c0_i32, %arg1 : i32, i32
  }
  func.func @transform_3(%arg0: i32, %arg1: i32, %arg2: i32) -> (i32, i32) {
    %c0_i32 = arith.constant 0 : i32
    return %arg0, %arg1 : i32, i32
  }
}

module attributes {stable_mosaic.version = 11 : i64} {
  func.func @_gcn_matmul_kernel(%arg0: i32, %arg1: i32, %arg2: i32, %arg3: memref<128x128xbf16, #tpu.memory_space<vmem>>, %arg4: memref<128x128xbf16, #tpu.memory_space<vmem>>, %arg5: memref<128x128xbf16, #tpu.memory_space<vmem>>, %arg6: memref<128x128xf32, #tpu.memory_space<vmem>>) attributes {dimension_semantics = [#tpu.dimension_semantics<parallel>, #tpu.dimension_semantics<parallel>, #tpu.dimension_semantics<arbitrary>], iteration_bounds = array<i64: 1, 1, 1>, scalar_prefetch = 0 : i64, scratch_operands = 1 : i64, tpu.core_type = #tpu.core_type<tc>, window_params = [{transform_indices = @transform_0, window_bounds = array<i64: 128, 128>}, {transform_indices = @transform_1, window_bounds = array<i64: 128, 128>}, {transform_indices = @transform_2, window_bounds = array<i64: 128, 128>}]} {
    %c0_i32 = arith.constant 0 : i32
    %0 = arith.cmpi eq, %arg2, %c0_i32 : i32
    %1 = arith.extui %0 : i1 to i32
    %c0_i32_0 = arith.constant 0 : i32
    %2 = arith.cmpi ne, %1, %c0_i32_0 : i32
    scf.if %2 {
      %cst_10 = arith.constant 0.000000e+00 : f32
      %12 = vector.broadcast %cst_10 : f32 to vector<128x128xf32>
      %c0_11 = arith.constant 0 : index
      %c0_12 = arith.constant 0 : index
      %13 = vector.load %arg6[%c0_11, %c0_12] : memref<128x128xf32, #tpu.memory_space<vmem>>, vector<128x128xf32>
      tpu.vector_store %arg6[%c0_11, %c0_12], %12 {strides = array<i32>} : memref<128x128xf32, #tpu.memory_space<vmem>>, vector<128x128xf32>,
    } else {
    }
    %c0 = arith.constant 0 : index
    %c0_1 = arith.constant 0 : index
    %3 = vector.load %arg6[%c0, %c0_1] : memref<128x128xf32, #tpu.memory_space<vmem>>, vector<128x128xf32>
    %c0_2 = arith.constant 0 : index
    %c0_3 = arith.constant 0 : index
    %4 = vector.load %arg3[%c0_2, %c0_3] : memref<128x128xbf16, #tpu.memory_space<vmem>>, vector<128x128xbf16>
    %c0_4 = arith.constant 0 : index
    %c0_5 = arith.constant 0 : index
    %5 = vector.load %arg4[%c0_4, %c0_5] : memref<128x128xbf16, #tpu.memory_space<vmem>>, vector<128x128xbf16>
    %cst = arith.constant dense<0.000000e+00> : vector<128x128xf32>
    %6 = tpu.matmul %4, %5, %cst {dimension_numbers = #tpu.dot_dimension_numbers<[1], [0], [0], [1], [0, 0, 1, 1], [], []>} : vector<128x128xbf16>, vector<128x128xbf16>, vector<128x128xf32> -> vector<128x128xf32>
    %7 = arith.addf %3, %6 : vector<128x128xf32>
    %c0_6 = arith.constant 0 : index
    %c0_7 = arith.constant 0 : index
    %8 = vector.load %arg6[%c0_6, %c0_7] : memref<128x128xf32, #tpu.memory_space<vmem>>, vector<128x128xf32>
    tpu.vector_store %arg6[%c0_6, %c0_7], %7 {strides = array<i32>} : memref<128x128xf32, #tpu.memory_space<vmem>>, vector<128x128xf32>,
    %c0_i32_8 = arith.constant 0 : i32
    %9 = arith.cmpi eq, %arg2, %c0_i32_8 : i32
    %10 = arith.extui %9 : i1 to i32
    %c0_i32_9 = arith.constant 0 : i32
    %11 = arith.cmpi ne, %10, %c0_i32_9 : i32
    scf.if %11 {
      %c0_10 = arith.constant 0 : index
      %c0_11 = arith.constant 0 : index
      %12 = vector.load %arg6[%c0_10, %c0_11] : memref<128x128xf32, #tpu.memory_space<vmem>>, vector<128x128xf32>
      %13 = arith.truncf %12 : vector<128x128xf32> to vector<128x128xbf16>
      %c0_12 = arith.constant 0 : index
      %c0_13 = arith.constant 0 : index
      %14 = vector.load %arg5[%c0_12, %c0_13] : memref<128x128xbf16, #tpu.memory_space<vmem>>, vector<128x128xbf16>
      tpu.vector_store %arg5[%c0_12, %c0_13], %13 {strides = array<i32>} : memref<128x128xbf16, #tpu.memory_space<vmem>>, vector<128x128xbf16>,
    } else {
    }
    return
  }
  func.func @transform_0(%arg0: i32, %arg1: i32, %arg2: i32) -> (i32, i32) {
    %c0_i32 = arith.constant 0 : i32
    return %arg0, %arg2 : i32, i32
  }
  func.func @transform_1(%arg0: i32, %arg1: i32, %arg2: i32) -> (i32, i32) {
    %c0_i32 = arith.constant 0 : i32
    return %arg2, %arg1 : i32, i32
  }
  func.func @transform_2(%arg0: i32, %arg1: i32, %arg2: i32) -> (i32, i32) {
    %c0_i32 = arith.constant 0 : i32
    return %arg0, %arg1 : i32, i32
  }
}

module attributes {stable_mosaic.version = 11 : i64} {
  func.func @_gcn_matmul_kernel(%arg0: i32, %arg1: i32, %arg2: i32, %arg3: memref<128x128xbf16, #tpu.memory_space<vmem>>, %arg4: memref<128x128xbf16, #tpu.memory_space<vmem>>, %arg5: memref<1x128xf32, #tpu.memory_space<vmem>>, %arg6: memref<128x128xf32, #tpu.memory_space<vmem>>, %arg7: memref<128x128xf32, #tpu.memory_space<vmem>>) attributes {dimension_semantics = [#tpu.dimension_semantics<parallel>, #tpu.dimension_semantics<parallel>, #tpu.dimension_semantics<arbitrary>], iteration_bounds = array<i64: 1, 1, 1>, scalar_prefetch = 0 : i64, scratch_operands = 1 : i64, tpu.core_type = #tpu.core_type<tc>, window_params = [{transform_indices = @transform_0, window_bounds = array<i64: 128, 128>}, {transform_indices = @transform_1, window_bounds = array<i64: 128, 128>}, {transform_indices = @transform_2, window_bounds = array<i64: 1, 128>}, {transform_indices = @transform_3, window_bounds = array<i64: 128, 128>}]} {
    %c0_i32 = arith.constant 0 : i32
    %0 = arith.cmpi eq, %arg2, %c0_i32 : i32
    %1 = arith.extui %0 : i1 to i32
    %c0_i32_0 = arith.constant 0 : i32
    %2 = arith.cmpi ne, %1, %c0_i32_0 : i32
    scf.if %2 {
      %cst_10 = arith.constant 0.000000e+00 : f32
      %12 = vector.broadcast %cst_10 : f32 to vector<128x128xf32>
      %c0_11 = arith.constant 0 : index
      %c0_12 = arith.constant 0 : index
      %13 = vector.load %arg7[%c0_11, %c0_12] : memref<128x128xf32, #tpu.memory_space<vmem>>, vector<128x128xf32>
      tpu.vector_store %arg7[%c0_11, %c0_12], %12 {strides = array<i32>} : memref<128x128xf32, #tpu.memory_space<vmem>>, vector<128x128xf32>,
    } else {
    }
    %c0 = arith.constant 0 : index
    %c0_1 = arith.constant 0 : index
    %3 = vector.load %arg7[%c0, %c0_1] : memref<128x128xf32, #tpu.memory_space<vmem>>, vector<128x128xf32>
    %c0_2 = arith.constant 0 : index
    %c0_3 = arith.constant 0 : index
    %4 = vector.load %arg3[%c0_2, %c0_3] : memref<128x128xbf16, #tpu.memory_space<vmem>>, vector<128x128xbf16>
    %c0_4 = arith.constant 0 : index
    %c0_5 = arith.constant 0 : index
    %5 = vector.load %arg4[%c0_4, %c0_5] : memref<128x128xbf16, #tpu.memory_space<vmem>>, vector<128x128xbf16>
    %cst = arith.constant dense<0.000000e+00> : vector<128x128xf32>
    %6 = tpu.matmul %4, %5, %cst {dimension_numbers = #tpu.dot_dimension_numbers<[1], [0], [0], [1], [0, 0, 1, 1], [], []>} : vector<128x128xbf16>, vector<128x128xbf16>, vector<128x128xf32> -> vector<128x128xf32>
    %7 = arith.addf %3, %6 : vector<128x128xf32>
    %c0_6 = arith.constant 0 : index
    %c0_7 = arith.constant 0 : index
    %8 = vector.load %arg7[%c0_6, %c0_7] : memref<128x128xf32, #tpu.memory_space<vmem>>, vector<128x128xf32>
    tpu.vector_store %arg7[%c0_6, %c0_7], %7 {strides = array<i32>} : memref<128x128xf32, #tpu.memory_space<vmem>>, vector<128x128xf32>,
    %c0_i32_8 = arith.constant 0 : i32
    %9 = arith.cmpi eq, %arg2, %c0_i32_8 : i32
    %10 = arith.extui %9 : i1 to i32
    %c0_i32_9 = arith.constant 0 : i32
    %11 = arith.cmpi ne, %10, %c0_i32_9 : i32
    scf.if %11 {
      %c0_10 = arith.constant 0 : index
      %c0_11 = arith.constant 0 : index
      %12 = vector.load %arg7[%c0_10, %c0_11] : memref<128x128xf32, #tpu.memory_space<vmem>>, vector<128x128xf32>
      %c0_12 = arith.constant 0 : index
      %c0_13 = arith.constant 0 : index
      %13 = vector.load %arg5[%c0_12, %c0_13] : memref<1x128xf32, #tpu.memory_space<vmem>>, vector<1x128xf32>
      %14 = vector.broadcast %13 : vector<1x128xf32> to vector<128x128xf32>
      %15 = arith.addf %12, %14 : vector<128x128xf32>
      %16 = tpu.iota {dimensions = array<i32: 1>} : vector<128x128xi32>
      %c7_i32 = arith.constant 7 : i32
      %17 = vector.broadcast %c7_i32 : i32 to vector<128x128xi32>
      %18 = arith.cmpi slt, %16, %17 : vector<128x128xi32>
      %cst_14 = arith.constant -1.000000e+30 : f32
      %19 = vector.broadcast %cst_14 : f32 to vector<128x128xf32>
      %20 = arith.select %18, %15, %19 : vector<128x128xi1>, vector<128x128xf32>
      %cst_15 = arith.constant dense<0xFF800000> : vector<128xf32>
      %21 = vector.multi_reduction <maximumf>, %20, %cst_15 [1] : vector<128x128xf32> to vector<128xf32>
      %22 = vector.shape_cast %21 : vector<128xf32> to vector<128x1xf32>
      %23 = vector.broadcast %22 : vector<128x1xf32> to vector<128x128xf32>
      %24 = arith.subf %20, %23 : vector<128x128xf32>
      %25 = math.exp %24 : vector<128x128xf32>
      %cst_16 = arith.constant 0.000000e+00 : f32
      %26 = vector.broadcast %cst_16 : f32 to vector<128x128xf32>
      %27 = arith.select %18, %25, %26 : vector<128x128xi1>, vector<128x128xf32>
      %cst_17 = arith.constant dense<0.000000e+00> : vector<128xf32>
      %28 = vector.multi_reduction <add>, %27, %cst_17 [1] : vector<128x128xf32> to vector<128xf32>
      %29 = vector.shape_cast %28 : vector<128xf32> to vector<128x1xf32>
      %30 = vector.broadcast %22 : vector<128x1xf32> to vector<128x128xf32>
      %31 = arith.subf %20, %30 : vector<128x128xf32>
      %32 = math.log %29 : vector<128x1xf32>
      %33 = vector.broadcast %32 : vector<128x1xf32> to vector<128x128xf32>
      %34 = arith.subf %31, %33 : vector<128x128xf32>
      %c0_18 = arith.constant 0 : index
      %c0_19 = arith.constant 0 : index
      %35 = vector.load %arg6[%c0_18, %c0_19] : memref<128x128xf32, #tpu.memory_space<vmem>>, vector<128x128xf32>
      tpu.vector_store %arg6[%c0_18, %c0_19], %34 {strides = array<i32>} : memref<128x128xf32, #tpu.memory_space<vmem>>, vector<128x128xf32>,
    } else {
    }
    return
  }
  func.func @transform_0(%arg0: i32, %arg1: i32, %arg2: i32) -> (i32, i32) {
    %c0_i32 = arith.constant 0 : i32
    return %arg0, %arg2 : i32, i32
  }
  func.func @transform_1(%arg0: i32, %arg1: i32, %arg2: i32) -> (i32, i32) {
    %c0_i32 = arith.constant 0 : i32
    return %arg2, %arg1 : i32, i32
  }
  func.func @transform_2(%arg0: i32, %arg1: i32, %arg2: i32) -> (i32, i32) {
    %c0_i32 = arith.constant 0 : i32
    %c0_i32_0 = arith.constant 0 : i32
    return %c0_i32, %arg1 : i32, i32
  }
  func.func @transform_3(%arg0: i32, %arg1: i32, %arg2: i32) -> (i32, i32) {
    %c0_i32 = arith.constant 0 : i32
    return %arg0, %arg1 : i32, i32
  }
}

</mosaic_0001>

<llo_original>
// kernel: gcn_forward_pallas.5
$region0: #{gcn_forward_pallas.5}
  #allocation0 [shape = 'u32[]', space=smem, size = 0x4, offset = 0x4, fixed_abs, tag = 'smem constant byte address 0x4 - core index']
  #allocation1 [shape = 'u32[144,128]{1,0:T(1,128)}', space=vmem, size = 0x12000, scoped, tag = 'internal scratch']
  #allocation2 [shape = 'f32[128,128]{1,0:T(8,128)}', space=vmem, size = 0x10000, scoped, tag = 'scratch operand']
  %s0 = inlined_call_operand.vmem [shape: bf16[128,128], index: 0, kind: input, shape index: {}]
  %s1 = inlined_call_operand.vmem [shape: bf16[128,128], index: 1, kind: input, shape index: {}]
  %s2 = inlined_call_operand.vmem [shape: f32[1,128], index: 2, kind: input, shape index: {}]
  %s3 = inlined_call_operand.vmem [shape: bf16[128,128], index: 3, kind: output, shape index: {}]
  %s4 = sld [smem:[#allocation0]]
  $region30: #{gcn_forward_pallas.5} parent=0
    _
  %s6 = ssub.s32 1, %s4
  %s7 = scalar_select 0, %s6, %s4
  // Predicated region
  $region2: #{gcn_forward_pallas.5} parent=0 // pred_check
    _
  $region3: #{gcn_forward_pallas.5} parent=0 // pred_check_branch
    %9 = sbr.rel (0) target = $region5
  $region4: #{gcn_forward_pallas.5} parent=0 // pred_region
    _
  $region5: #{gcn_forward_pallas.5} parent=0 // pred_fallthru
    _
  // Predicated region
  $region6: #{gcn_forward_pallas.5} parent=0 // pred_check
    _
  $region7: #{gcn_forward_pallas.5} parent=0 // pred_check_branch
    %11 = sbr.rel (0) target = $region9
  $region8: #{gcn_forward_pallas.5} parent=0 // pred_region
    _
  $region9: #{gcn_forward_pallas.5} parent=0 // pred_fallthru
    _
  // Predicated region
  $region10: #{gcn_forward_pallas.5} parent=0 // pred_check
    _
  $region11: #{gcn_forward_pallas.5} parent=0 // pred_check_branch
    %13 = sbr.rel (0) target = $region13
  $region12: #{gcn_forward_pallas.5} parent=0 // pred_region
    _
  $region13: #{gcn_forward_pallas.5} parent=0 // pred_fallthru
    _
  %p15 = scmp.eq.s32.totalorder 0, 0
  // Predicated region
  $region14: #{gcn_forward_pallas.5} parent=0 // pred_check
    %p16 = pneg %p15
  $region15: #{gcn_forward_pallas.5} parent=0 // pred_check_branch
    %18 = sbr.rel (%p16) target = $region17
  $region16: #{gcn_forward_pallas.5} parent=0 // pred_region
    %19 = vst [vmem:[#allocation2] sm:$0xff] 0.0
    %20 = vst [vmem:[#allocation2 + $0x8] sm:$0xff] 0.0
    %21 = vst [vmem:[#allocation2 + $0x10] sm:$0xff] 0.0
    %22 = vst [vmem:[#allocation2 + $0x18] sm:$0xff] 0.0
    %23 = vst [vmem:[#allocation2 + $0x20] sm:$0xff] 0.0
    %24 = vst [vmem:[#allocation2 + $0x28] sm:$0xff] 0.0
    %25 = vst [vmem:[#allocation2 + $0x30] sm:$0xff] 0.0
    %26 = vst [vmem:[#allocation2 + $0x38] sm:$0xff] 0.0
    %27 = vst [vmem:[#allocation2 + $0x40] sm:$0xff] 0.0
    %28 = vst [vmem:[#allocation2 + $0x48] sm:$0xff] 0.0
    %29 = vst [vmem:[#allocation2 + $0x50] sm:$0xff] 0.0
    %30 = vst [vmem:[#allocation2 + $0x58] sm:$0xff] 0.0
    %31 = vst [vmem:[#allocation2 + $0x60] sm:$0xff] 0.0
    %32 = vst [vmem:[#allocation2 + $0x68] sm:$0xff] 0.0
    %33 = vst [vmem:[#allocation2 + $0x70] sm:$0xff] 0.0
    %34 = vst [vmem:[#allocation2 + $0x78] sm:$0xff] 0.0
  $region17: #{gcn_forward_pallas.5} parent=0 // pred_fallthru
    _
  %v35 = vld [vmem:[#allocation2] sm:$0xff]
  %v36 = vld [vmem:[#allocation2 + $0x8] sm:$0xff]
  %v37 = vld [vmem:[#allocation2 + $0x10] sm:$0xff]
  %v38 = vld [vmem:[#allocation2 + $0x18] sm:$0xff]
  %v39 = vld [vmem:[#allocation2 + $0x20] sm:$0xff]
  %v40 = vld [vmem:[#allocation2 + $0x28] sm:$0xff]
  %v41 = vld [vmem:[#allocation2 + $0x30] sm:$0xff]
  %v42 = vld [vmem:[#allocation2 + $0x38] sm:$0xff]
  %v43 = vld [vmem:[#allocation2 + $0x40] sm:$0xff]
  %v44 = vld [vmem:[#allocation2 + $0x48] sm:$0xff]
  %v45 = vld [vmem:[#allocation2 + $0x50] sm:$0xff]
  %v46 = vld [vmem:[#allocation2 + $0x58] sm:$0xff]
  %v47 = vld [vmem:[#allocation2 + $0x60] sm:$0xff]
  %v48 = vld [vmem:[#allocation2 + $0x68] sm:$0xff]
  %v49 = vld [vmem:[#allocation2 + $0x70] sm:$0xff]
  %v50 = vld [vmem:[#allocation2 + $0x78] sm:$0xff]
  %v51 = vld [vmem:[%s0] sm:$0xf]
  %v52 = vld [vmem:[%s0 + $0x4] sm:$0xf]
  %v53 = vld [vmem:[%s0 + $0x8] sm:$0xf]
  %v54 = vld [vmem:[%s0 + $0xc] sm:$0xf]
  %v55 = vld [vmem:[%s0 + $0x10] sm:$0xf]
  %v56 = vld [vmem:[%s0 + $0x14] sm:$0xf]
  %v57 = vld [vmem:[%s0 + $0x18] sm:$0xf]
  %v58 = vld [vmem:[%s0 + $0x1c] sm:$0xf]
  %v59 = vld [vmem:[%s0 + $0x20] sm:$0xf]
  %v60 = vld [vmem:[%s0 + $0x24] sm:$0xf]
  %v61 = vld [vmem:[%s0 + $0x28] sm:$0xf]
  %v62 = vld [vmem:[%s0 + $0x2c] sm:$0xf]
  %v63 = vld [vmem:[%s0 + $0x30] sm:$0xf]
  %v64 = vld [vmem:[%s0 + $0x34] sm:$0xf]
  %v65 = vld [vmem:[%s0 + $0x38] sm:$0xf]
  %v66 = vld [vmem:[%s0 + $0x3c] sm:$0xf]
  %v67 = vld [vmem:[%s1] sm:$0xf]
  %v68 = vld [vmem:[%s1 + $0x4] sm:$0xf]
  %v69 = vld [vmem:[%s1 + $0x8] sm:$0xf]
  %v70 = vld [vmem:[%s1 + $0xc] sm:$0xf]
  %v71 = vld [vmem:[%s1 + $0x10] sm:$0xf]
  %v72 = vld [vmem:[%s1 + $0x14] sm:$0xf]
  %v73 = vld [vmem:[%s1 + $0x18] sm:$0xf]
  %v74 = vld [vmem:[%s1 + $0x1c] sm:$0xf]
  %v75 = vld [vmem:[%s1 + $0x20] sm:$0xf]
  %v76 = vld [vmem:[%s1 + $0x24] sm:$0xf]
  %v77 = vld [vmem:[%s1 + $0x28] sm:$0xf]
  %v78 = vld [vmem:[%s1 + $0x2c] sm:$0xf]
  %v79 = vld [vmem:[%s1 + $0x30] sm:$0xf]
  %v80 = vld [vmem:[%s1 + $0x34] sm:$0xf]
  %v81 = vld [vmem:[%s1 + $0x38] sm:$0xf]
  %v82 = vld [vmem:[%s1 + $0x3c] sm:$0xf]
  %v99 = vunpack.c.l.b16 %v51
  %v100 = vunpack.c.l.b16 %v52
  %v101 = vunpack.c.l.b16 %v53
  %v102 = vunpack.c.l.b16 %v54
  %v103 = vunpack.c.l.b16 %v55
  %v104 = vunpack.c.l.b16 %v56
  %v105 = vunpack.c.l.b16 %v57
  %v106 = vunpack.c.l.b16 %v58
  %v107 = vunpack.c.l.b16 %v59
  %v108 = vunpack.c.l.b16 %v60
  %v109 = vunpack.c.l.b16 %v61
  %v110 = vunpack.c.l.b16 %v62
  %v111 = vunpack.c.l.b16 %v63
  %v112 = vunpack.c.l.b16 %v64
  %v113 = vunpack.c.l.b16 %v65
  %v114 = vunpack.c.l.b16 %v66
  %v115 = vpack.c.b16 %v100, %v99
  %v116 = vpack.c.b16 %v102, %v101
  %v117 = vpack.c.b16 %v104, %v103
  %v118 = vpack.c.b16 %v106, %v105
  %v119 = vpack.c.b16 %v108, %v107
  %v120 = vpack.c.b16 %v110, %v109
  %v121 = vpack.c.b16 %v112, %v111
  %v122 = vpack.c.b16 %v114, %v113
  %v147 = vunpack.c.l.b16 %v67
  %v148 = vunpack.c.l.b16 %v68
  %v149 = vunpack.c.l.b16 %v69
  %v150 = vunpack.c.l.b16 %v70
  %v151 = vunpack.c.l.b16 %v71
  %v152 = vunpack.c.l.b16 %v72
  %v153 = vunpack.c.l.b16 %v73
  %v154 = vunpack.c.l.b16 %v74
  %v155 = vunpack.c.l.b16 %v75
  %v156 = vunpack.c.l.b16 %v76
  %v157 = vunpack.c.l.b16 %v77
  %v158 = vunpack.c.l.b16 %v78
  %v159 = vunpack.c.l.b16 %v79
  %v160 = vunpack.c.l.b16 %v80
  %v161 = vunpack.c.l.b16 %v81
  %v162 = vunpack.c.l.b16 %v82
  %v163 = vpack.c.b16 %v148, %v147
  %v164 = vpack.c.b16 %v150, %v149
  %v165 = vpack.c.b16 %v152, %v151
  %v166 = vpack.c.b16 %v154, %v153
  %v167 = vpack.c.b16 %v156, %v155
  %v168 = vpack.c.b16 %v158, %v157
  %v169 = vpack.c.b16 %v160, %v159
  %v170 = vpack.c.b16 %v162, %v161
  %179 = vmatprep.subr.bf16.mxu0 0
  %180 = vmatpush1.bf16.msra.mxu0 %v163
  %181 = vmatprep.subr.bf16.mxu0 0
  %182 = vmatpush1.bf16.msra.mxu0 %v164
  %183 = vmatprep.subr.bf16.mxu0 0
  %184 = vmatpush1.bf16.msra.mxu0 %v165
  %185 = vmatprep.subr.bf16.mxu0 0
  %186 = vmatpush1.bf16.msra.mxu0 %v166
  %187 = vmatprep.subr.bf16.mxu0 0
  %188 = vmatpush1.bf16.msra.mxu0 %v167
  %189 = vmatprep.subr.bf16.mxu0 0
  %190 = vmatpush1.bf16.msra.mxu0 %v168
  %191 = vmatprep.subr.bf16.mxu0 0
  %192 = vmatpush1.bf16.msra.mxu0 %v169
  %193 = vmatprep.subr.bf16.mxu0 0
  %194 = vmatpush1.bf16.msra.mxu0 %v170
  %195 = vmatprep.subr.bf16.mxu0 0
  %196 = vmatpush1.bf16.msra.mxu0 0
  %197 = vmatprep.subr.bf16.mxu0 0
  %198 = vmatpush1.bf16.msra.mxu0 0
  %199 = vmatprep.subr.bf16.mxu0 0
  %200 = vmatpush1.bf16.msra.mxu0 0
  %201 = vmatprep.subr.bf16.mxu0 0
  %202 = vmatpush1.bf16.msra.mxu0 0
  %203 = vmatprep.subr.bf16.mxu0 0
  %204 = vmatpush1.bf16.msra.mxu0 0
  %205 = vmatprep.subr.bf16.mxu0 0
  %206 = vmatpush1.bf16.msra.mxu0 0
  %207 = vmatprep.subr.bf16.mxu0 0
  %208 = vmatpush1.bf16.msra.mxu0 0
  %209 = vmatprep.subr.bf16.mxu0 0
  %210 = vmatpush1.bf16.msra.mxu0 0
  %211 = vmatprep.mubr.bf16.mxu0 0
  %212 = vmatmul.mubr.bf16.gmra.mrb[0].mxu0 %v115
  %v213 = vpop.f32.mrb[0].mxu0
  %v214 = vadd.f32 0.0, %v213
  %v215 = vpop.f32.mrb[0].mxu0
  %v216 = vpop.f32.mrb[0].mxu0
  %v217 = vadd.f32 0.0, %v216
  %v218 = vpop.f32.mrb[0].mxu0
  %219 = vmatprep.mubr.bf16.mxu0 0
  %220 = vmatmul.mubr.bf16.gmra.mrb[0].mxu0 %v116
  %v221 = vpop.f32.mrb[0].mxu0
  %v222 = vadd.f32 0.0, %v221
  %v223 = vpop.f32.mrb[0].mxu0
  %v224 = vpop.f32.mrb[0].mxu0
  %v225 = vadd.f32 0.0, %v224
  %v226 = vpop.f32.mrb[0].mxu0
  %227 = vmatprep.mubr.bf16.mxu0 0
  %228 = vmatmul.mubr.bf16.gmra.mrb[0].mxu0 %v117
  %v229 = vpop.f32.mrb[0].mxu0
  %v230 = vadd.f32 0.0, %v229
  %v231 = vpop.f32.mrb[0].mxu0
  %v232 = vpop.f32.mrb[0].mxu0
  %v233 = vadd.f32 0.0, %v232
  %v234 = vpop.f32.mrb[0].mxu0
  %235 = vmatprep.mubr.bf16.mxu0 0
  %236 = vmatmul.mubr.bf16.gmra.mrb[0].mxu0 %v118
  %v237 = vpop.f32.mrb[0].mxu0
  %v238 = vadd.f32 0.0, %v237
  %v239 = vpop.f32.mrb[0].mxu0
  %v240 = vpop.f32.mrb[0].mxu0
  %v241 = vadd.f32 0.0, %v240
  %v242 = vpop.f32.mrb[0].mxu0
  %243 = vmatprep.mubr.bf16.mxu0 0
  %244 = vmatmul.mubr.bf16.gmra.mrb[0].mxu0 %v119
  %v245 = vpop.f32.mrb[0].mxu0
  %v246 = vadd.f32 0.0, %v245
  %v247 = vpop.f32.mrb[0].mxu0
  %v248 = vpop.f32.mrb[0].mxu0
  %v249 = vadd.f32 0.0, %v248
  %v250 = vpop.f32.mrb[0].mxu0
  %251 = vmatprep.mubr.bf16.mxu0 0
  %252 = vmatmul.mubr.bf16.gmra.mrb[0].mxu0 %v120
  %v253 = vpop.f32.mrb[0].mxu0
  %v254 = vadd.f32 0.0, %v253
  %v255 = vpop.f32.mrb[0].mxu0
  %v256 = vpop.f32.mrb[0].mxu0
  %v257 = vadd.f32 0.0, %v256
  %v258 = vpop.f32.mrb[0].mxu0
  %259 = vmatprep.mubr.bf16.mxu0 0
  %260 = vmatmul.mubr.bf16.gmra.mrb[0].mxu0 %v121
  %v261 = vpop.f32.mrb[0].mxu0
  %v262 = vadd.f32 0.0, %v261
  %v263 = vpop.f32.mrb[0].mxu0
  %v264 = vpop.f32.mrb[0].mxu0
  %v265 = vadd.f32 0.0, %v264
  %v266 = vpop.f32.mrb[0].mxu0
  %267 = vmatprep.mubr.bf16.mxu0 0
  %268 = vmatmul.mubr.bf16.gmra.mrb[0].mxu0 %v122
  %v269 = vpop.f32.mrb[0].mxu0
  %v270 = vadd.f32 0.0, %v269
  %v271 = vpop.f32.mrb[0].mxu0
  %v272 = vpop.f32.mrb[0].mxu0
  %v273 = vadd.f32 0.0, %v272
  %v274 = vpop.f32.mrb[0].mxu0
  %275 = vdwg.mxu0
  %v276 = vadd.f32 %v35, %v214
  %v277 = vadd.f32 %v36, %v217
  %v278 = vadd.f32 %v37, %v222
  %v279 = vadd.f32 %v38, %v225
  %v280 = vadd.f32 %v39, %v230
  %v281 = vadd.f32 %v40, %v233
  %v282 = vadd.f32 %v41, %v238
  %v283 = vadd.f32 %v42, %v241
  %v284 = vadd.f32 %v43, %v246
  %v285 = vadd.f32 %v44, %v249
  %v286 = vadd.f32 %v45, %v254
  %v287 = vadd.f32 %v46, %v257
  %v288 = vadd.f32 %v47, %v262
  %v289 = vadd.f32 %v48, %v265
  %v290 = vadd.f32 %v49, %v270
  %v291 = vadd.f32 %v50, %v273
  %292 = vst [vmem:[#allocation2] sm:$0xff] %v276
  %293 = vst [vmem:[#allocation2 + $0x8] sm:$0xff] %v277
  %294 = vst [vmem:[#allocation2 + $0x10] sm:$0xff] %v278
  %295 = vst [vmem:[#allocation2 + $0x18] sm:$0xff] %v279
  %296 = vst [vmem:[#allocation2 + $0x20] sm:$0xff] %v280
  %297 = vst [vmem:[#allocation2 + $0x28] sm:$0xff] %v281
  %298 = vst [vmem:[#allocation2 + $0x30] sm:$0xff] %v282
  %299 = vst [vmem:[#allocation2 + $0x38] sm:$0xff] %v283
  %300 = vst [vmem:[#allocation2 + $0x40] sm:$0xff] %v284
  %301 = vst [vmem:[#allocation2 + $0x48] sm:$0xff] %v285
  %302 = vst [vmem:[#allocation2 + $0x50] sm:$0xff] %v286
  %303 = vst [vmem:[#allocation2 + $0x58] sm:$0xff] %v287
  %304 = vst [vmem:[#allocation2 + $0x60] sm:$0xff] %v288
  %305 = vst [vmem:[#allocation2 + $0x68] sm:$0xff] %v289
  %306 = vst [vmem:[#allocation2 + $0x70] sm:$0xff] %v290
  %307 = vst [vmem:[#allocation2 + $0x78] sm:$0xff] %v291
  // Predicated region
  $region18: #{gcn_forward_pallas.5} parent=0 // pred_check
    %p308 = pneg %p15
  $region19: #{gcn_forward_pallas.5} parent=0 // pred_check_branch
    %310 = sbr.rel (%p308) target = $region21
  $region20: #{gcn_forward_pallas.5} parent=0 // pred_region
    %v311 = vld [vmem:[#allocation2] sm:$0xff]
    %v312 = vld [vmem:[#allocation2 + $0x8] sm:$0xff]
    %v313 = vld [vmem:[#allocation2 + $0x10] sm:$0xff]
    %v314 = vld [vmem:[#allocation2 + $0x18] sm:$0xff]
    %v315 = vld [vmem:[#allocation2 + $0x20] sm:$0xff]
    %v316 = vld [vmem:[#allocation2 + $0x28] sm:$0xff]
    %v317 = vld [vmem:[#allocation2 + $0x30] sm:$0xff]
    %v318 = vld [vmem:[#allocation2 + $0x38] sm:$0xff]
    %v319 = vld [vmem:[#allocation2 + $0x40] sm:$0xff]
    %v320 = vld [vmem:[#allocation2 + $0x48] sm:$0xff]
    %v321 = vld [vmem:[#allocation2 + $0x50] sm:$0xff]
    %v322 = vld [vmem:[#allocation2 + $0x58] sm:$0xff]
    %v323 = vld [vmem:[#allocation2 + $0x60] sm:$0xff]
    %v324 = vld [vmem:[#allocation2 + $0x68] sm:$0xff]
    %v325 = vld [vmem:[#allocation2 + $0x70] sm:$0xff]
    %v326 = vld [vmem:[#allocation2 + $0x78] sm:$0xff]
    %v327 = vld [vmem:[%s2] sm:$0x1]
    %v329 = vlaneseq
    %v330 = vshrl.u32 %v329, 7
    %v331 = vsub.s32 0, %v330
    %v332 = vrot.slane %v327, %v331
    %v334 = vadd.f32 %v311, %v332
    %v335 = vadd.f32 %v312, %v332
    %v336 = vadd.f32 %v313, %v332
    %v337 = vadd.f32 %v314, %v332
    %v338 = vadd.f32 %v315, %v332
    %v339 = vadd.f32 %v316, %v332
    %v340 = vadd.f32 %v317, %v332
    %v341 = vadd.f32 %v318, %v332
    %v342 = vadd.f32 %v319, %v332
    %v343 = vadd.f32 %v320, %v332
    %v344 = vadd.f32 %v321, %v332
    %v345 = vadd.f32 %v322, %v332
    %v346 = vadd.f32 %v323, %v332
    %v347 = vadd.f32 %v324, %v332
    %v348 = vadd.f32 %v325, %v332
    %v349 = vadd.f32 %v326, %v332
    %v350 = vmax.f32 %v334, 0.0
    %v351 = vmax.f32 %v335, 0.0
    %v352 = vmax.f32 %v336, 0.0
    %v353 = vmax.f32 %v337, 0.0
    %v354 = vmax.f32 %v338, 0.0
    %v355 = vmax.f32 %v339, 0.0
    %v356 = vmax.f32 %v340, 0.0
    %v357 = vmax.f32 %v341, 0.0
    %v358 = vmax.f32 %v342, 0.0
    %v359 = vmax.f32 %v343, 0.0
    %v360 = vmax.f32 %v344, 0.0
    %v361 = vmax.f32 %v345, 0.0
    %v362 = vmax.f32 %v346, 0.0
    %v363 = vmax.f32 %v347, 0.0
    %v364 = vmax.f32 %v348, 0.0
    %v365 = vmax.f32 %v349, 0.0
    %v366 = vpack.c.bf16 %v351, %v350
    %v367 = vpack.c.bf16 %v353, %v352
    %v368 = vpack.c.bf16 %v355, %v354
    %v369 = vpack.c.bf16 %v357, %v356
    %v370 = vpack.c.bf16 %v359, %v358
    %v371 = vpack.c.bf16 %v361, %v360
    %v372 = vpack.c.bf16 %v363, %v362
    %v373 = vpack.c.bf16 %v365, %v364
    %v382 = vunpack.c.l.b16 %v366
    %v383 = vunpack.c.h.b16 %v366
    %v384 = vunpack.c.l.b16 %v367
    %v385 = vunpack.c.h.b16 %v367
    %v386 = vunpack.c.l.b16 %v368
    %v387 = vunpack.c.h.b16 %v368
    %v388 = vunpack.c.l.b16 %v369
    %v389 = vunpack.c.h.b16 %v369
    %v390 = vunpack.c.l.b16 %v370
    %v391 = vunpack.c.h.b16 %v370
    %v392 = vunpack.c.l.b16 %v371
    %v393 = vunpack.c.h.b16 %v371
    %v394 = vunpack.c.l.b16 %v372
    %v395 = vunpack.c.h.b16 %v372
    %v396 = vunpack.c.l.b16 %v373
    %v397 = vunpack.c.h.b16 %v373
    %v398 = vpack.c.b16 %v382, %v382
    %v399 = vpack.c.b16 %v383, %v383
    %v400 = vpack.c.b16 %v384, %v384
    %v401 = vpack.c.b16 %v385, %v385
    %v402 = vpack.c.b16 %v386, %v386
    %v403 = vpack.c.b16 %v387, %v387
    %v404 = vpack.c.b16 %v388, %v388
    %v405 = vpack.c.b16 %v389, %v389
    %v406 = vpack.c.b16 %v390, %v390
    %v407 = vpack.c.b16 %v391, %v391
    %v408 = vpack.c.b16 %v392, %v392
    %v409 = vpack.c.b16 %v393, %v393
    %v410 = vpack.c.b16 %v394, %v394
    %v411 = vpack.c.b16 %v395, %v395
    %v412 = vpack.c.b16 %v396, %v396
    %v413 = vpack.c.b16 %v397, %v397
    %430 = vst [vmem:[%s3] sm:$0xf] %v398
    %431 = vst [vmem:[%s3 + $0x4] sm:$0xf] %v399
    %432 = vst [vmem:[%s3 + $0x8] sm:$0xf] %v400
    %433 = vst [vmem:[%s3 + $0xc] sm:$0xf] %v401
    %434 = vst [vmem:[%s3 + $0x10] sm:$0xf] %v402
    %435 = vst [vmem:[%s3 + $0x14] sm:$0xf] %v403
    %436 = vst [vmem:[%s3 + $0x18] sm:$0xf] %v404
    %437 = vst [vmem:[%s3 + $0x1c] sm:$0xf] %v405
    %438 = vst [vmem:[%s3 + $0x20] sm:$0xf] %v406
    %439 = vst [vmem:[%s3 + $0x24] sm:$0xf] %v407
    %440 = vst [vmem:[%s3 + $0x28] sm:$0xf] %v408
    %441 = vst [vmem:[%s3 + $0x2c] sm:$0xf] %v409
    %442 = vst [vmem:[%s3 + $0x30] sm:$0xf] %v410
    %443 = vst [vmem:[%s3 + $0x34] sm:$0xf] %v411
    %444 = vst [vmem:[%s3 + $0x38] sm:$0xf] %v412
    %445 = vst [vmem:[%s3 + $0x3c] sm:$0xf] %v413
  $region21: #{gcn_forward_pallas.5} parent=0 // pred_fallthru
    _
  // Predicated region
  $region22: #{gcn_forward_pallas.5} parent=0 // pred_check
    _
  $region23: #{gcn_forward_pallas.5} parent=0 // pred_check_branch
    %447 = sbr.rel (0) target = $region25
  $region24: #{gcn_forward_pallas.5} parent=0 // pred_region
    _
  $region25: #{gcn_forward_pallas.5} parent=0 // pred_fallthru
    _
  // Predicated region
  $region26: #{gcn_forward_pallas.5} parent=0 // pred_check
    _
  $region27: #{gcn_forward_pallas.5} parent=0 // pred_check_branch
    %449 = sbr.rel (0) target = $region29
  $region28: #{gcn_forward_pallas.5} parent=0 // pred_region
    _
  $region29: #{gcn_forward_pallas.5} parent=0 // pred_fallthru
    _

// kernel: gcn_forward_pallas.7
$region0: #{gcn_forward_pallas.7}
  #allocation0 [shape = 'u32[]', space=smem, size = 0x4, offset = 0x4, fixed_abs, tag = 'smem constant byte address 0x4 - core index']
  #allocation1 [shape = 'u32[144,128]{1,0:T(1,128)}', space=vmem, size = 0x12000, scoped, tag = 'internal scratch']
  #allocation2 [shape = 'f32[128,128]{1,0:T(8,128)}', space=vmem, size = 0x10000, scoped, tag = 'scratch operand']
  %s0 = inlined_call_operand.vmem [shape: bf16[128,128], index: 0, kind: input, shape index: {}]
  %s1 = inlined_call_operand.vmem [shape: bf16[128,128], index: 1, kind: input, shape index: {}]
  %s2 = inlined_call_operand.vmem [shape: f32[1,128], index: 2, kind: input, shape index: {}]
  %s3 = inlined_call_operand.vmem [shape: f32[128,128], index: 3, kind: output, shape index: {}]
  %s4 = sld [smem:[#allocation0]]
  $region30: #{gcn_forward_pallas.7} parent=0
    _
  %s6 = ssub.s32 1, %s4
  %s7 = scalar_select 0, %s6, %s4
  // Predicated region
  $region2: #{gcn_forward_pallas.7} parent=0 // pred_check
    _
  $region3: #{gcn_forward_pallas.7} parent=0 // pred_check_branch
    %9 = sbr.rel (0) target = $region5
  $region4: #{gcn_forward_pallas.7} parent=0 // pred_region
    _
  $region5: #{gcn_forward_pallas.7} parent=0 // pred_fallthru
    _
  // Predicated region
  $region6: #{gcn_forward_pallas.7} parent=0 // pred_check
    _
  $region7: #{gcn_forward_pallas.7} parent=0 // pred_check_branch
    %11 = sbr.rel (0) target = $region9
  $region8: #{gcn_forward_pallas.7} parent=0 // pred_region
    _
  $region9: #{gcn_forward_pallas.7} parent=0 // pred_fallthru
    _
  // Predicated region
  $region10: #{gcn_forward_pallas.7} parent=0 // pred_check
    _
  $region11: #{gcn_forward_pallas.7} parent=0 // pred_check_branch
    %13 = sbr.rel (0) target = $region13
  $region12: #{gcn_forward_pallas.7} parent=0 // pred_region
    _
  $region13: #{gcn_forward_pallas.7} parent=0 // pred_fallthru
    _
  %p15 = scmp.eq.s32.totalorder 0, 0
  // Predicated region
  $region14: #{gcn_forward_pallas.7} parent=0 // pred_check
    %p16 = pneg %p15
  $region15: #{gcn_forward_pallas.7} parent=0 // pred_check_branch
    %18 = sbr.rel (%p16) target = $region17
  $region16: #{gcn_forward_pallas.7} parent=0 // pred_region
    %19 = vst [vmem:[#allocation2] sm:$0xff] 0.0
    %20 = vst [vmem:[#allocation2 + $0x8] sm:$0xff] 0.0
    %21 = vst [vmem:[#allocation2 + $0x10] sm:$0xff] 0.0
    %22 = vst [vmem:[#allocation2 + $0x18] sm:$0xff] 0.0
    %23 = vst [vmem:[#allocation2 + $0x20] sm:$0xff] 0.0
    %24 = vst [vmem:[#allocation2 + $0x28] sm:$0xff] 0.0
    %25 = vst [vmem:[#allocation2 + $0x30] sm:$0xff] 0.0
    %26 = vst [vmem:[#allocation2 + $0x38] sm:$0xff] 0.0
    %27 = vst [vmem:[#allocation2 + $0x40] sm:$0xff] 0.0
    %28 = vst [vmem:[#allocation2 + $0x48] sm:$0xff] 0.0
    %29 = vst [vmem:[#allocation2 + $0x50] sm:$0xff] 0.0
    %30 = vst [vmem:[#allocation2 + $0x58] sm:$0xff] 0.0
    %31 = vst [vmem:[#allocation2 + $0x60] sm:$0xff] 0.0
    %32 = vst [vmem:[#allocation2 + $0x68] sm:$0xff] 0.0
    %33 = vst [vmem:[#allocation2 + $0x70] sm:$0xff] 0.0
    %34 = vst [vmem:[#allocation2 + $0x78] sm:$0xff] 0.0
  $region17: #{gcn_forward_pallas.7} parent=0 // pred_fallthru
    _
  %v35 = vld [vmem:[#allocation2] sm:$0xff]
  %v36 = vld [vmem:[#allocation2 + $0x8] sm:$0xff]
  %v37 = vld [vmem:[#allocation2 + $0x10] sm:$0xff]
  %v38 = vld [vmem:[#allocation2 + $0x18] sm:$0xff]
  %v39 = vld [vmem:[#allocation2 + $0x20] sm:$0xff]
  %v40 = vld [vmem:[#allocation2 + $0x28] sm:$0xff]
  %v41 = vld [vmem:[#allocation2 + $0x30] sm:$0xff]
  %v42 = vld [vmem:[#allocation2 + $0x38] sm:$0xff]
  %v43 = vld [vmem:[#allocation2 + $0x40] sm:$0xff]
  %v44 = vld [vmem:[#allocation2 + $0x48] sm:$0xff]
  %v45 = vld [vmem:[#allocation2 + $0x50] sm:$0xff]
  %v46 = vld [vmem:[#allocation2 + $0x58] sm:$0xff]
  %v47 = vld [vmem:[#allocation2 + $0x60] sm:$0xff]
  %v48 = vld [vmem:[#allocation2 + $0x68] sm:$0xff]
  %v49 = vld [vmem:[#allocation2 + $0x70] sm:$0xff]
  %v50 = vld [vmem:[#allocation2 + $0x78] sm:$0xff]
  %v51 = vld [vmem:[%s0] sm:$0xf]
  %v52 = vld [vmem:[%s0 + $0x4] sm:$0xf]
  %v53 = vld [vmem:[%s0 + $0x8] sm:$0xf]
  %v54 = vld [vmem:[%s0 + $0xc] sm:$0xf]
  %v55 = vld [vmem:[%s0 + $0x10] sm:$0xf]
  %v56 = vld [vmem:[%s0 + $0x14] sm:$0xf]
  %v57 = vld [vmem:[%s0 + $0x18] sm:$0xf]
  %v58 = vld [vmem:[%s0 + $0x1c] sm:$0xf]
  %v59 = vld [vmem:[%s0 + $0x20] sm:$0xf]
  %v60 = vld [vmem:[%s0 + $0x24] sm:$0xf]
  %v61 = vld [vmem:[%s0 + $0x28] sm:$0xf]
  %v62 = vld [vmem:[%s0 + $0x2c] sm:$0xf]
  %v63 = vld [vmem:[%s0 + $0x30] sm:$0xf]
  %v64 = vld [vmem:[%s0 + $0x34] sm:$0xf]
  %v65 = vld [vmem:[%s0 + $0x38] sm:$0xf]
  %v66 = vld [vmem:[%s0 + $0x3c] sm:$0xf]
  %v67 = vld [vmem:[%s1] sm:$0xf]
  %v68 = vld [vmem:[%s1 + $0x4] sm:$0xf]
  %v69 = vld [vmem:[%s1 + $0x8] sm:$0xf]
  %v70 = vld [vmem:[%s1 + $0xc] sm:$0xf]
  %v71 = vld [vmem:[%s1 + $0x10] sm:$0xf]
  %v72 = vld [vmem:[%s1 + $0x14] sm:$0xf]
  %v73 = vld [vmem:[%s1 + $0x18] sm:$0xf]
  %v74 = vld [vmem:[%s1 + $0x1c] sm:$0xf]
  %v75 = vld [vmem:[%s1 + $0x20] sm:$0xf]
  %v76 = vld [vmem:[%s1 + $0x24] sm:$0xf]
  %v77 = vld [vmem:[%s1 + $0x28] sm:$0xf]
  %v78 = vld [vmem:[%s1 + $0x2c] sm:$0xf]
  %v79 = vld [vmem:[%s1 + $0x30] sm:$0xf]
  %v80 = vld [vmem:[%s1 + $0x34] sm:$0xf]
  %v81 = vld [vmem:[%s1 + $0x38] sm:$0xf]
  %v82 = vld [vmem:[%s1 + $0x3c] sm:$0xf]
  %v99 = vunpack.c.l.b16 %v51
  %v100 = vunpack.c.l.b16 %v52
  %v101 = vunpack.c.l.b16 %v53
  %v102 = vunpack.c.l.b16 %v54
  %v103 = vunpack.c.l.b16 %v55
  %v104 = vunpack.c.l.b16 %v56
  %v105 = vunpack.c.l.b16 %v57
  %v106 = vunpack.c.l.b16 %v58
  %v107 = vunpack.c.l.b16 %v59
  %v108 = vunpack.c.l.b16 %v60
  %v109 = vunpack.c.l.b16 %v61
  %v110 = vunpack.c.l.b16 %v62
  %v111 = vunpack.c.l.b16 %v63
  %v112 = vunpack.c.l.b16 %v64
  %v113 = vunpack.c.l.b16 %v65
  %v114 = vunpack.c.l.b16 %v66
  %v115 = vpack.c.b16 %v100, %v99
  %v116 = vpack.c.b16 %v102, %v101
  %v117 = vpack.c.b16 %v104, %v103
  %v118 = vpack.c.b16 %v106, %v105
  %v119 = vpack.c.b16 %v108, %v107
  %v120 = vpack.c.b16 %v110, %v109
  %v121 = vpack.c.b16 %v112, %v111
  %v122 = vpack.c.b16 %v114, %v113
  %v147 = vunpack.c.l.b16 %v67
  %v148 = vunpack.c.l.b16 %v68
  %v149 = vunpack.c.l.b16 %v69
  %v150 = vunpack.c.l.b16 %v70
  %v151 = vunpack.c.l.b16 %v71
  %v152 = vunpack.c.l.b16 %v72
  %v153 = vunpack.c.l.b16 %v73
  %v154 = vunpack.c.l.b16 %v74
  %v155 = vunpack.c.l.b16 %v75
  %v156 = vunpack.c.l.b16 %v76
  %v157 = vunpack.c.l.b16 %v77
  %v158 = vunpack.c.l.b16 %v78
  %v159 = vunpack.c.l.b16 %v79
  %v160 = vunpack.c.l.b16 %v80
  %v161 = vunpack.c.l.b16 %v81
  %v162 = vunpack.c.l.b16 %v82
  %v163 = vpack.c.b16 %v148, %v147
  %v164 = vpack.c.b16 %v150, %v149
  %v165 = vpack.c.b16 %v152, %v151
  %v166 = vpack.c.b16 %v154, %v153
  %v167 = vpack.c.b16 %v156, %v155
  %v168 = vpack.c.b16 %v158, %v157
  %v169 = vpack.c.b16 %v160, %v159
  %v170 = vpack.c.b16 %v162, %v161
  %179 = vmatprep.subr.bf16.mxu0 0
  %180 = vmatpush1.bf16.msra.mxu0 %v163
  %181 = vmatprep.subr.bf16.mxu0 0
  %182 = vmatpush1.bf16.msra.mxu0 %v164
  %183 = vmatprep.subr.bf16.mxu0 0
  %184 = vmatpush1.bf16.msra.mxu0 %v165
  %185 = vmatprep.subr.bf16.mxu0 0
  %186 = vmatpush1.bf16.msra.mxu0 %v166
  %187 = vmatprep.subr.bf16.mxu0 0
  %188 = vmatpush1.bf16.msra.mxu0 %v167
  %189 = vmatprep.subr.bf16.mxu0 0
  %190 = vmatpush1.bf16.msra.mxu0 %v168
  %191 = vmatprep.subr.bf16.mxu0 0
  %192 = vmatpush1.bf16.msra.mxu0 %v169
  %193 = vmatprep.subr.bf16.mxu0 0
  %194 = vmatpush1.bf16.msra.mxu0 %v170
  %195 = vmatprep.subr.bf16.mxu0 0
  %196 = vmatpush1.bf16.msra.mxu0 0
  %197 = vmatprep.subr.bf16.mxu0 0
  %198 = vmatpush1.bf16.msra.mxu0 0
  %199 = vmatprep.subr.bf16.mxu0 0
  %200 = vmatpush1.bf16.msra.mxu0 0
  %201 = vmatprep.subr.bf16.mxu0 0
  %202 = vmatpush1.bf16.msra.mxu0 0
  %203 = vmatprep.subr.bf16.mxu0 0
  %204 = vmatpush1.bf16.msra.mxu0 0
  %205 = vmatprep.subr.bf16.mxu0 0
  %206 = vmatpush1.bf16.msra.mxu0 0
  %207 = vmatprep.subr.bf16.mxu0 0
  %208 = vmatpush1.bf16.msra.mxu0 0
  %209 = vmatprep.subr.bf16.mxu0 0
  %210 = vmatpush1.bf16.msra.mxu0 0
  %211 = vmatprep.mubr.bf16.mxu0 0
  %212 = vmatmul.mubr.bf16.gmra.mrb[0].mxu0 %v115
  %v213 = vpop.f32.mrb[0].mxu0
  %v214 = vadd.f32 0.0, %v213
  %v215 = vpop.f32.mrb[0].mxu0
  %v216 = vpop.f32.mrb[0].mxu0
  %v217 = vadd.f32 0.0, %v216
  %v218 = vpop.f32.mrb[0].mxu0
  %219 = vmatprep.mubr.bf16.mxu0 0
  %220 = vmatmul.mubr.bf16.gmra.mrb[0].mxu0 %v116
  %v221 = vpop.f32.mrb[0].mxu0
  %v222 = vadd.f32 0.0, %v221
  %v223 = vpop.f32.mrb[0].mxu0
  %v224 = vpop.f32.mrb[0].mxu0
  %v225 = vadd.f32 0.0, %v224
  %v226 = vpop.f32.mrb[0].mxu0
  %227 = vmatprep.mubr.bf16.mxu0 0
  %228 = vmatmul.mubr.bf16.gmra.mrb[0].mxu0 %v117
  %v229 = vpop.f32.mrb[0].mxu0
  %v230 = vadd.f32 0.0, %v229
  %v231 = vpop.f32.mrb[0].mxu0
  %v232 = vpop.f32.mrb[0].mxu0
  %v233 = vadd.f32 0.0, %v232
  %v234 = vpop.f32.mrb[0].mxu0
  %235 = vmatprep.mubr.bf16.mxu0 0
  %236 = vmatmul.mubr.bf16.gmra.mrb[0].mxu0 %v118
  %v237 = vpop.f32.mrb[0].mxu0
  %v238 = vadd.f32 0.0, %v237
  %v239 = vpop.f32.mrb[0].mxu0
  %v240 = vpop.f32.mrb[0].mxu0
  %v241 = vadd.f32 0.0, %v240
  %v242 = vpop.f32.mrb[0].mxu0
  %243 = vmatprep.mubr.bf16.mxu0 0
  %244 = vmatmul.mubr.bf16.gmra.mrb[0].mxu0 %v119
  %v245 = vpop.f32.mrb[0].mxu0
  %v246 = vadd.f32 0.0, %v245
  %v247 = vpop.f32.mrb[0].mxu0
  %v248 = vpop.f32.mrb[0].mxu0
  %v249 = vadd.f32 0.0, %v248
  %v250 = vpop.f32.mrb[0].mxu0
  %251 = vmatprep.mubr.bf16.mxu0 0
  %252 = vmatmul.mubr.bf16.gmra.mrb[0].mxu0 %v120
  %v253 = vpop.f32.mrb[0].mxu0
  %v254 = vadd.f32 0.0, %v253
  %v255 = vpop.f32.mrb[0].mxu0
  %v256 = vpop.f32.mrb[0].mxu0
  %v257 = vadd.f32 0.0, %v256
  %v258 = vpop.f32.mrb[0].mxu0
  %259 = vmatprep.mubr.bf16.mxu0 0
  %260 = vmatmul.mubr.bf16.gmra.mrb[0].mxu0 %v121
  %v261 = vpop.f32.mrb[0].mxu0
  %v262 = vadd.f32 0.0, %v261
  %v263 = vpop.f32.mrb[0].mxu0
  %v264 = vpop.f32.mrb[0].mxu0
  %v265 = vadd.f32 0.0, %v264
  %v266 = vpop.f32.mrb[0].mxu0
  %267 = vmatprep.mubr.bf16.mxu0 0
  %268 = vmatmul.mubr.bf16.gmra.mrb[0].mxu0 %v122
  %v269 = vpop.f32.mrb[0].mxu0
  %v270 = vadd.f32 0.0, %v269
  %v271 = vpop.f32.mrb[0].mxu0
  %v272 = vpop.f32.mrb[0].mxu0
  %v273 = vadd.f32 0.0, %v272
  %v274 = vpop.f32.mrb[0].mxu0
  %275 = vdwg.mxu0
  %v276 = vadd.f32 %v35, %v214
  %v277 = vadd.f32 %v36, %v217
  %v278 = vadd.f32 %v37, %v222
  %v279 = vadd.f32 %v38, %v225
  %v280 = vadd.f32 %v39, %v230
  %v281 = vadd.f32 %v40, %v233
  %v282 = vadd.f32 %v41, %v238
  %v283 = vadd.f32 %v42, %v241
  %v284 = vadd.f32 %v43, %v246
  %v285 = vadd.f32 %v44, %v249
  %v286 = vadd.f32 %v45, %v254
  %v287 = vadd.f32 %v46, %v257
  %v288 = vadd.f32 %v47, %v262
  %v289 = vadd.f32 %v48, %v265
  %v290 = vadd.f32 %v49, %v270
  %v291 = vadd.f32 %v50, %v273
  %292 = vst [vmem:[#allocation2] sm:$0xff] %v276
  %293 = vst [vmem:[#allocation2 + $0x8] sm:$0xff] %v277
  %294 = vst [vmem:[#allocation2 + $0x10] sm:$0xff] %v278
  %295 = vst [vmem:[#allocation2 + $0x18] sm:$0xff] %v279
  %296 = vst [vmem:[#allocation2 + $0x20] sm:$0xff] %v280
  %297 = vst [vmem:[#allocation2 + $0x28] sm:$0xff] %v281
  %298 = vst [vmem:[#allocation2 + $0x30] sm:$0xff] %v282
  %299 = vst [vmem:[#allocation2 + $0x38] sm:$0xff] %v283
  %300 = vst [vmem:[#allocation2 + $0x40] sm:$0xff] %v284
  %301 = vst [vmem:[#allocation2 + $0x48] sm:$0xff] %v285
  %302 = vst [vmem:[#allocation2 + $0x50] sm:$0xff] %v286
  %303 = vst [vmem:[#allocation2 + $0x58] sm:$0xff] %v287
  %304 = vst [vmem:[#allocation2 + $0x60] sm:$0xff] %v288
  %305 = vst [vmem:[#allocation2 + $0x68] sm:$0xff] %v289
  %306 = vst [vmem:[#allocation2 + $0x70] sm:$0xff] %v290
  %307 = vst [vmem:[#allocation2 + $0x78] sm:$0xff] %v291
  // Predicated region
  $region18: #{gcn_forward_pallas.7} parent=0 // pred_check
    %p308 = pneg %p15
  $region19: #{gcn_forward_pallas.7} parent=0 // pred_check_branch
    %310 = sbr.rel (%p308) target = $region21
  $region20: #{gcn_forward_pallas.7} parent=0 // pred_region
    %v311 = vld [vmem:[#allocation2] sm:$0xff]
    %v312 = vld [vmem:[#allocation2 + $0x8] sm:$0xff]
    %v313 = vld [vmem:[#allocation2 + $0x10] sm:$0xff]
    %v314 = vld [vmem:[#allocation2 + $0x18] sm:$0xff]
    %v315 = vld [vmem:[#allocation2 + $0x20] sm:$0xff]
    %v316 = vld [vmem:[#allocation2 + $0x28] sm:$0xff]
    %v317 = vld [vmem:[#allocation2 + $0x30] sm:$0xff]
    %v318 = vld [vmem:[#allocation2 + $0x38] sm:$0xff]
    %v319 = vld [vmem:[#allocation2 + $0x40] sm:$0xff]
    %v320 = vld [vmem:[#allocation2 + $0x48] sm:$0xff]
    %v321 = vld [vmem:[#allocation2 + $0x50] sm:$0xff]
    %v322 = vld [vmem:[#allocation2 + $0x58] sm:$0xff]
    %v323 = vld [vmem:[#allocation2 + $0x60] sm:$0xff]
    %v324 = vld [vmem:[#allocation2 + $0x68] sm:$0xff]
    %v325 = vld [vmem:[#allocation2 + $0x70] sm:$0xff]
    %v326 = vld [vmem:[#allocation2 + $0x78] sm:$0xff]
    %v327 = vld [vmem:[%s2] sm:$0x1]
    %v329 = vlaneseq
    %v330 = vshrl.u32 %v329, 7
    %v331 = vsub.s32 0, %v330
    %v332 = vrot.slane %v327, %v331
    %v334 = vadd.f32 %v311, %v332
    %v335 = vadd.f32 %v312, %v332
    %v336 = vadd.f32 %v313, %v332
    %v337 = vadd.f32 %v314, %v332
    %v338 = vadd.f32 %v315, %v332
    %v339 = vadd.f32 %v316, %v332
    %v340 = vadd.f32 %v317, %v332
    %v341 = vadd.f32 %v318, %v332
    %v342 = vadd.f32 %v319, %v332
    %v343 = vadd.f32 %v320, %v332
    %v344 = vadd.f32 %v321, %v332
    %v345 = vadd.f32 %v322, %v332
    %v346 = vadd.f32 %v323, %v332
    %v347 = vadd.f32 %v324, %v332
    %v348 = vadd.f32 %v325, %v332
    %v349 = vadd.f32 %v326, %v332
    %v350 = vlaneseq
    %v351 = vand.u32 %v350, 127
    %vm352 = vcmp.lt.s32.totalorder %v351, 7
    %v353 = vsel %vm352, %v334, -1e+30
    %v354 = vsel %vm352, %v335, -1e+30
    %v355 = vsel %vm352, %v336, -1e+30
    %v356 = vsel %vm352, %v337, -1e+30
    %v357 = vsel %vm352, %v338, -1e+30
    %v358 = vsel %vm352, %v339, -1e+30
    %v359 = vsel %vm352, %v340, -1e+30
    %v360 = vsel %vm352, %v341, -1e+30
    %v361 = vsel %vm352, %v342, -1e+30
    %v362 = vsel %vm352, %v343, -1e+30
    %v363 = vsel %vm352, %v344, -1e+30
    %v364 = vsel %vm352, %v345, -1e+30
    %v365 = vsel %vm352, %v346, -1e+30
    %v366 = vsel %vm352, %v347, -1e+30
    %v367 = vsel %vm352, %v348, -1e+30
    %v368 = vsel %vm352, %v349, -1e+30
    %369 = vmax.xlane.f32.xlu0 %v353
    %v370 = vpop.xlane.xlu0 %369
    %371 = vmax.xlane.f32.xlu0 %v354
    %v372 = vpop.xlane.xlu0 %371
    %373 = vmax.xlane.f32.xlu0 %v355
    %v374 = vpop.xlane.xlu0 %373
    %375 = vmax.xlane.f32.xlu0 %v356
    %v376 = vpop.xlane.xlu0 %375
    %377 = vmax.xlane.f32.xlu0 %v357
    %v378 = vpop.xlane.xlu0 %377
    %379 = vmax.xlane.f32.xlu0 %v358
    %v380 = vpop.xlane.xlu0 %379
    %381 = vmax.xlane.f32.xlu0 %v359
    %v382 = vpop.xlane.xlu0 %381
    %383 = vmax.xlane.f32.xlu0 %v360
    %v384 = vpop.xlane.xlu0 %383
    %385 = vmax.xlane.f32.xlu0 %v361
    %v386 = vpop.xlane.xlu0 %385
    %387 = vmax.xlane.f32.xlu0 %v362
    %v388 = vpop.xlane.xlu0 %387
    %389 = vmax.xlane.f32.xlu0 %v363
    %v390 = vpop.xlane.xlu0 %389
    %391 = vmax.xlane.f32.xlu0 %v364
    %v392 = vpop.xlane.xlu0 %391
    %393 = vmax.xlane.f32.xlu0 %v365
    %v394 = vpop.xlane.xlu0 %393
    %395 = vmax.xlane.f32.xlu0 %v366
    %v396 = vpop.xlane.xlu0 %395
    %397 = vmax.xlane.f32.xlu0 %v367
    %v398 = vpop.xlane.xlu0 %397
    %399 = vmax.xlane.f32.xlu0 %v368
    %v400 = vpop.xlane.xlu0 %399
    %v401 = vsub.f32 %v353, %v370
    %v402 = vsub.f32 %v354, %v372
    %v403 = vsub.f32 %v355, %v374
    %v404 = vsub.f32 %v356, %v376
    %v405 = vsub.f32 %v357, %v378
    %v406 = vsub.f32 %v358, %v380
    %v407 = vsub.f32 %v359, %v382
    %v408 = vsub.f32 %v360, %v384
    %v409 = vsub.f32 %v361, %v386
    %v410 = vsub.f32 %v362, %v388
    %v411 = vsub.f32 %v363, %v390
    %v412 = vsub.f32 %v364, %v392
    %v413 = vsub.f32 %v365, %v394
    %v414 = vsub.f32 %v366, %v396
    %v415 = vsub.f32 %v367, %v398
    %v416 = vsub.f32 %v368, %v400
    %v417 = vmul.f32 %v401, 1.442695
    %v418 = vpow.pop %v417
    %v419 = vmul.f32 %v402, 1.442695
    %v420 = vpow.pop %v419
    %v421 = vmul.f32 %v403, 1.442695
    %v422 = vpow.pop %v421
    %v423 = vmul.f32 %v404, 1.442695
    %v424 = vpow.pop %v423
    %v425 = vmul.f32 %v405, 1.442695
    %v426 = vpow.pop %v425
    %v427 = vmul.f32 %v406, 1.442695
    %v428 = vpow.pop %v427
    %v429 = vmul.f32 %v407, 1.442695
    %v430 = vpow.pop %v429
    %v431 = vmul.f32 %v408, 1.442695
    %v432 = vpow.pop %v431
    %v433 = vmul.f32 %v409, 1.442695
    %v434 = vpow.pop %v433
    %v435 = vmul.f32 %v410, 1.442695
    %v436 = vpow.pop %v435
    %v437 = vmul.f32 %v411, 1.442695
    %v438 = vpow.pop %v437
    %v439 = vmul.f32 %v412, 1.442695
    %v440 = vpow.pop %v439
    %v441 = vmul.f32 %v413, 1.442695
    %v442 = vpow.pop %v441
    %v443 = vmul.f32 %v414, 1.442695
    %v444 = vpow.pop %v443
    %v445 = vmul.f32 %v415, 1.442695
    %v446 = vpow.pop %v445
    %v447 = vmul.f32 %v416, 1.442695
    %v448 = vpow.pop %v447
    %v449 = vsel %vm352, %v418, 0.0
    %v450 = vsel %vm352, %v420, 0.0
    %v451 = vsel %vm352, %v422, 0.0
    %v452 = vsel %vm352, %v424, 0.0
    %v453 = vsel %vm352, %v426, 0.0
    %v454 = vsel %vm352, %v428, 0.0
    %v455 = vsel %vm352, %v430, 0.0
    %v456 = vsel %vm352, %v432, 0.0
    %v457 = vsel %vm352, %v434, 0.0
    %v458 = vsel %vm352, %v436, 0.0
    %v459 = vsel %vm352, %v438, 0.0
    %v460 = vsel %vm352, %v440, 0.0
    %v461 = vsel %vm352, %v442, 0.0
    %v462 = vsel %vm352, %v444, 0.0
    %v463 = vsel %vm352, %v446, 0.0
    %v464 = vsel %vm352, %v448, 0.0
    %465 = vadd.xlane.f32.xlu0 %v449
    %v466 = vpop.xlane.xlu0 %465
    %467 = vadd.xlane.f32.xlu0 %v450
    %v468 = vpop.xlane.xlu0 %467
    %469 = vadd.xlane.f32.xlu0 %v451
    %v470 = vpop.xlane.xlu0 %469
    %471 = vadd.xlane.f32.xlu0 %v452
    %v472 = vpop.xlane.xlu0 %471
    %473 = vadd.xlane.f32.xlu0 %v453
    %v474 = vpop.xlane.xlu0 %473
    %475 = vadd.xlane.f32.xlu0 %v454
    %v476 = vpop.xlane.xlu0 %475
    %477 = vadd.xlane.f32.xlu0 %v455
    %v478 = vpop.xlane.xlu0 %477
    %479 = vadd.xlane.f32.xlu0 %v456
    %v480 = vpop.xlane.xlu0 %479
    %481 = vadd.xlane.f32.xlu0 %v457
    %v482 = vpop.xlane.xlu0 %481
    %483 = vadd.xlane.f32.xlu0 %v458
    %v484 = vpop.xlane.xlu0 %483
    %485 = vadd.xlane.f32.xlu0 %v459
    %v486 = vpop.xlane.xlu0 %485
    %487 = vadd.xlane.f32.xlu0 %v460
    %v488 = vpop.xlane.xlu0 %487
    %489 = vadd.xlane.f32.xlu0 %v461
    %v490 = vpop.xlane.xlu0 %489
    %491 = vadd.xlane.f32.xlu0 %v462
    %v492 = vpop.xlane.xlu0 %491
    %493 = vadd.xlane.f32.xlu0 %v463
    %v494 = vpop.xlane.xlu0 %493
    %495 = vadd.xlane.f32.xlu0 %v464
    %v496 = vpop.xlane.xlu0 %495
    %v497 = vlog2.pop %v466
    %v498 = vmul.f32 %v497, 0.6931472
    %v499 = vlog2.pop %v468
    %v500 = vmul.f32 %v499, 0.6931472
    %v501 = vlog2.pop %v470
    %v502 = vmul.f32 %v501, 0.6931472
    %v503 = vlog2.pop %v472
    %v504 = vmul.f32 %v503, 0.6931472
    %v505 = vlog2.pop %v474
    %v506 = vmul.f32 %v505, 0.6931472
    %v507 = vlog2.pop %v476
    %v508 = vmul.f32 %v507, 0.6931472
    %v509 = vlog2.pop %v478
    %v510 = vmul.f32 %v509, 0.6931472
    %v511 = vlog2.pop %v480
    %v512 = vmul.f32 %v511, 0.6931472
    %v513 = vlog2.pop %v482
    %v514 = vmul.f32 %v513, 0.6931472
    %v515 = vlog2.pop %v484
    %v516 = vmul.f32 %v515, 0.6931472
    %v517 = vlog2.pop %v486
    %v518 = vmul.f32 %v517, 0.6931472
    %v519 = vlog2.pop %v488
    %v520 = vmul.f32 %v519, 0.6931472
    %v521 = vlog2.pop %v490
    %v522 = vmul.f32 %v521, 0.6931472
    %v523 = vlog2.pop %v492
    %v524 = vmul.f32 %v523, 0.6931472
    %v525 = vlog2.pop %v494
    %v526 = vmul.f32 %v525, 0.6931472
    %v527 = vlog2.pop %v496
    %v528 = vmul.f32 %v527, 0.6931472
    %v529 = vsub.f32 %v401, %v498
    %v530 = vsub.f32 %v402, %v500
    %v531 = vsub.f32 %v403, %v502
    %v532 = vsub.f32 %v404, %v504
    %v533 = vsub.f32 %v405, %v506
    %v534 = vsub.f32 %v406, %v508
    %v535 = vsub.f32 %v407, %v510
    %v536 = vsub.f32 %v408, %v512
    %v537 = vsub.f32 %v409, %v514
    %v538 = vsub.f32 %v410, %v516
    %v539 = vsub.f32 %v411, %v518
    %v540 = vsub.f32 %v412, %v520
    %v541 = vsub.f32 %v413, %v522
    %v542 = vsub.f32 %v414, %v524
    %v543 = vsub.f32 %v415, %v526
    %v544 = vsub.f32 %v416, %v528
    %545 = vst [vmem:[%s3] sm:$0xff] %v529
    %546 = vst [vmem:[%s3 + $0x8] sm:$0xff] %v530
    %547 = vst [vmem:[%s3 + $0x10] sm:$0xff] %v531
    %548 = vst [vmem:[%s3 + $0x18] sm:$0xff] %v532
    %549 = vst [vmem:[%s3 + $0x20] sm:$0xff] %v533
    %550 = vst [vmem:[%s3 + $0x28] sm:$0xff] %v534
    %551 = vst [vmem:[%s3 + $0x30] sm:$0xff] %v535
    %552 = vst [vmem:[%s3 + $0x38] sm:$0xff] %v536
    %553 = vst [vmem:[%s3 + $0x40] sm:$0xff] %v537
    %554 = vst [vmem:[%s3 + $0x48] sm:$0xff] %v538
    %555 = vst [vmem:[%s3 + $0x50] sm:$0xff] %v539
    %556 = vst [vmem:[%s3 + $0x58] sm:$0xff] %v540
    %557 = vst [vmem:[%s3 + $0x60] sm:$0xff] %v541
    %558 = vst [vmem:[%s3 + $0x68] sm:$0xff] %v542
    %559 = vst [vmem:[%s3 + $0x70] sm:$0xff] %v543
    %560 = vst [vmem:[%s3 + $0x78] sm:$0xff] %v544
  $region21: #{gcn_forward_pallas.7} parent=0 // pred_fallthru
    _
  // Predicated region
  $region22: #{gcn_forward_pallas.7} parent=0 // pred_check
    _
  $region23: #{gcn_forward_pallas.7} parent=0 // pred_check_branch
    %562 = sbr.rel (0) target = $region25
  $region24: #{gcn_forward_pallas.7} parent=0 // pred_region
    _
  $region25: #{gcn_forward_pallas.7} parent=0 // pred_fallthru
    _
  // Predicated region
  $region26: #{gcn_forward_pallas.7} parent=0 // pred_check
    _
  $region27: #{gcn_forward_pallas.7} parent=0 // pred_check_branch
    %564 = sbr.rel (0) target = $region29
  $region28: #{gcn_forward_pallas.7} parent=0 // pred_region
    _
  $region29: #{gcn_forward_pallas.7} parent=0 // pred_fallthru
    _

// kernel: gcn_forward_pallas.4
$region0: #{gcn_forward_pallas.4}
  #allocation0 [shape = 'u32[]', space=smem, size = 0x4, offset = 0x4, fixed_abs, tag = 'smem constant byte address 0x4 - core index']
  #allocation1 [shape = 'u32[144,128]{1,0:T(1,128)}', space=vmem, size = 0x12000, scoped, tag = 'internal scratch']
  #allocation2 [shape = 'f32[128,128]{1,0:T(8,128)}', space=vmem, size = 0x10000, scoped, tag = 'scratch operand']
  %s0 = inlined_call_operand.vmem [shape: bf16[128,128], index: 0, kind: input, shape index: {}]
  %s1 = inlined_call_operand.vmem [shape: bf16[128,128], index: 1, kind: input, shape index: {}]
  %s2 = inlined_call_operand.vmem [shape: bf16[128,128], index: 2, kind: output, shape index: {}]
  %s3 = sld [smem:[#allocation0]]
  $region26: #{gcn_forward_pallas.4} parent=0
    _
  %s5 = ssub.s32 1, %s3
  %s6 = scalar_select 0, %s5, %s3
  // Predicated region
  $region2: #{gcn_forward_pallas.4} parent=0 // pred_check
    _
  $region3: #{gcn_forward_pallas.4} parent=0 // pred_check_branch
    %8 = sbr.rel (0) target = $region5
  $region4: #{gcn_forward_pallas.4} parent=0 // pred_region
    _
  $region5: #{gcn_forward_pallas.4} parent=0 // pred_fallthru
    _
  // Predicated region
  $region6: #{gcn_forward_pallas.4} parent=0 // pred_check
    _
  $region7: #{gcn_forward_pallas.4} parent=0 // pred_check_branch
    %10 = sbr.rel (0) target = $region9
  $region8: #{gcn_forward_pallas.4} parent=0 // pred_region
    _
  $region9: #{gcn_forward_pallas.4} parent=0 // pred_fallthru
    _
  %p12 = scmp.eq.s32.totalorder 0, 0
  // Predicated region
  $region10: #{gcn_forward_pallas.4} parent=0 // pred_check
    %p13 = pneg %p12
  $region11: #{gcn_forward_pallas.4} parent=0 // pred_check_branch
    %15 = sbr.rel (%p13) target = $region13
  $region12: #{gcn_forward_pallas.4} parent=0 // pred_region
    %16 = vst [vmem:[#allocation2] sm:$0xff] 0.0
    %17 = vst [vmem:[#allocation2 + $0x8] sm:$0xff] 0.0
    %18 = vst [vmem:[#allocation2 + $0x10] sm:$0xff] 0.0
    %19 = vst [vmem:[#allocation2 + $0x18] sm:$0xff] 0.0
    %20 = vst [vmem:[#allocation2 + $0x20] sm:$0xff] 0.0
    %21 = vst [vmem:[#allocation2 + $0x28] sm:$0xff] 0.0
    %22 = vst [vmem:[#allocation2 + $0x30] sm:$0xff] 0.0
    %23 = vst [vmem:[#allocation2 + $0x38] sm:$0xff] 0.0
    %24 = vst [vmem:[#allocation2 + $0x40] sm:$0xff] 0.0
    %25 = vst [vmem:[#allocation2 + $0x48] sm:$0xff] 0.0
    %26 = vst [vmem:[#allocation2 + $0x50] sm:$0xff] 0.0
    %27 = vst [vmem:[#allocation2 + $0x58] sm:$0xff] 0.0
    %28 = vst [vmem:[#allocation2 + $0x60] sm:$0xff] 0.0
    %29 = vst [vmem:[#allocation2 + $0x68] sm:$0xff] 0.0
    %30 = vst [vmem:[#allocation2 + $0x70] sm:$0xff] 0.0
    %31 = vst [vmem:[#allocation2 + $0x78] sm:$0xff] 0.0
  $region13: #{gcn_forward_pallas.4} parent=0 // pred_fallthru
    _
  %v32 = vld [vmem:[#allocation2] sm:$0xff]
  %v33 = vld [vmem:[#allocation2 + $0x8] sm:$0xff]
  %v34 = vld [vmem:[#allocation2 + $0x10] sm:$0xff]
  %v35 = vld [vmem:[#allocation2 + $0x18] sm:$0xff]
  %v36 = vld [vmem:[#allocation2 + $0x20] sm:$0xff]
  %v37 = vld [vmem:[#allocation2 + $0x28] sm:$0xff]
  %v38 = vld [vmem:[#allocation2 + $0x30] sm:$0xff]
  %v39 = vld [vmem:[#allocation2 + $0x38] sm:$0xff]
  %v40 = vld [vmem:[#allocation2 + $0x40] sm:$0xff]
  %v41 = vld [vmem:[#allocation2 + $0x48] sm:$0xff]
  %v42 = vld [vmem:[#allocation2 + $0x50] sm:$0xff]
  %v43 = vld [vmem:[#allocation2 + $0x58] sm:$0xff]
  %v44 = vld [vmem:[#allocation2 + $0x60] sm:$0xff]
  %v45 = vld [vmem:[#allocation2 + $0x68] sm:$0xff]
  %v46 = vld [vmem:[#allocation2 + $0x70] sm:$0xff]
  %v47 = vld [vmem:[#allocation2 + $0x78] sm:$0xff]
  %v48 = vld [vmem:[%s0] sm:$0xf]
  %v49 = vld [vmem:[%s0 + $0x4] sm:$0xf]
  %v50 = vld [vmem:[%s0 + $0x8] sm:$0xf]
  %v51 = vld [vmem:[%s0 + $0xc] sm:$0xf]
  %v52 = vld [vmem:[%s0 + $0x10] sm:$0xf]
  %v53 = vld [vmem:[%s0 + $0x14] sm:$0xf]
  %v54 = vld [vmem:[%s0 + $0x18] sm:$0xf]
  %v55 = vld [vmem:[%s0 + $0x1c] sm:$0xf]
  %v56 = vld [vmem:[%s0 + $0x20] sm:$0xf]
  %v57 = vld [vmem:[%s0 + $0x24] sm:$0xf]
  %v58 = vld [vmem:[%s0 + $0x28] sm:$0xf]
  %v59 = vld [vmem:[%s0 + $0x2c] sm:$0xf]
  %v60 = vld [vmem:[%s0 + $0x30] sm:$0xf]
  %v61 = vld [vmem:[%s0 + $0x34] sm:$0xf]
  %v62 = vld [vmem:[%s0 + $0x38] sm:$0xf]
  %v63 = vld [vmem:[%s0 + $0x3c] sm:$0xf]
  %v64 = vld [vmem:[%s1] sm:$0xf]
  %v65 = vld [vmem:[%s1 + $0x4] sm:$0xf]
  %v66 = vld [vmem:[%s1 + $0x8] sm:$0xf]
  %v67 = vld [vmem:[%s1 + $0xc] sm:$0xf]
  %v68 = vld [vmem:[%s1 + $0x10] sm:$0xf]
  %v69 = vld [vmem:[%s1 + $0x14] sm:$0xf]
  %v70 = vld [vmem:[%s1 + $0x18] sm:$0xf]
  %v71 = vld [vmem:[%s1 + $0x1c] sm:$0xf]
  %v72 = vld [vmem:[%s1 + $0x20] sm:$0xf]
  %v73 = vld [vmem:[%s1 + $0x24] sm:$0xf]
  %v74 = vld [vmem:[%s1 + $0x28] sm:$0xf]
  %v75 = vld [vmem:[%s1 + $0x2c] sm:$0xf]
  %v76 = vld [vmem:[%s1 + $0x30] sm:$0xf]
  %v77 = vld [vmem:[%s1 + $0x34] sm:$0xf]
  %v78 = vld [vmem:[%s1 + $0x38] sm:$0xf]
  %v79 = vld [vmem:[%s1 + $0x3c] sm:$0xf]
  %v96 = vunpack.c.l.b16 %v48
  %v97 = vunpack.c.l.b16 %v49
  %v98 = vunpack.c.l.b16 %v50
  %v99 = vunpack.c.l.b16 %v51
  %v100 = vunpack.c.l.b16 %v52
  %v101 = vunpack.c.l.b16 %v53
  %v102 = vunpack.c.l.b16 %v54
  %v103 = vunpack.c.l.b16 %v55
  %v104 = vunpack.c.l.b16 %v56
  %v105 = vunpack.c.l.b16 %v57
  %v106 = vunpack.c.l.b16 %v58
  %v107 = vunpack.c.l.b16 %v59
  %v108 = vunpack.c.l.b16 %v60
  %v109 = vunpack.c.l.b16 %v61
  %v110 = vunpack.c.l.b16 %v62
  %v111 = vunpack.c.l.b16 %v63
  %v112 = vpack.c.b16 %v97, %v96
  %v113 = vpack.c.b16 %v99, %v98
  %v114 = vpack.c.b16 %v101, %v100
  %v115 = vpack.c.b16 %v103, %v102
  %v116 = vpack.c.b16 %v105, %v104
  %v117 = vpack.c.b16 %v107, %v106
  %v118 = vpack.c.b16 %v109, %v108
  %v119 = vpack.c.b16 %v111, %v110
  %v144 = vunpack.c.l.b16 %v64
  %v145 = vunpack.c.l.b16 %v65
  %v146 = vunpack.c.l.b16 %v66
  %v147 = vunpack.c.l.b16 %v67
  %v148 = vunpack.c.l.b16 %v68
  %v149 = vunpack.c.l.b16 %v69
  %v150 = vunpack.c.l.b16 %v70
  %v151 = vunpack.c.l.b16 %v71
  %v152 = vunpack.c.l.b16 %v72
  %v153 = vunpack.c.l.b16 %v73
  %v154 = vunpack.c.l.b16 %v74
  %v155 = vunpack.c.l.b16 %v75
  %v156 = vunpack.c.l.b16 %v76
  %v157 = vunpack.c.l.b16 %v77
  %v158 = vunpack.c.l.b16 %v78
  %v159 = vunpack.c.l.b16 %v79
  %v160 = vpack.c.b16 %v145, %v144
  %v161 = vpack.c.b16 %v147, %v146
  %v162 = vpack.c.b16 %v149, %v148
  %v163 = vpack.c.b16 %v151, %v150
  %v164 = vpack.c.b16 %v153, %v152
  %v165 = vpack.c.b16 %v155, %v154
  %v166 = vpack.c.b16 %v157, %v156
  %v167 = vpack.c.b16 %v159, %v158
  %176 = vmatprep.subr.bf16.mxu0 0
  %177 = vmatpush1.bf16.msra.mxu0 %v160
  %178 = vmatprep.subr.bf16.mxu0 0
  %179 = vmatpush1.bf16.msra.mxu0 %v161
  %180 = vmatprep.subr.bf16.mxu0 0
  %181 = vmatpush1.bf16.msra.mxu0 %v162
  %182 = vmatprep.subr.bf16.mxu0 0
  %183 = vmatpush1.bf16.msra.mxu0 %v163
  %184 = vmatprep.subr.bf16.mxu0 0
  %185 = vmatpush1.bf16.msra.mxu0 %v164
  %186 = vmatprep.subr.bf16.mxu0 0
  %187 = vmatpush1.bf16.msra.mxu0 %v165
  %188 = vmatprep.subr.bf16.mxu0 0
  %189 = vmatpush1.bf16.msra.mxu0 %v166
  %190 = vmatprep.subr.bf16.mxu0 0
  %191 = vmatpush1.bf16.msra.mxu0 %v167
  %192 = vmatprep.subr.bf16.mxu0 0
  %193 = vmatpush1.bf16.msra.mxu0 0
  %194 = vmatprep.subr.bf16.mxu0 0
  %195 = vmatpush1.bf16.msra.mxu0 0
  %196 = vmatprep.subr.bf16.mxu0 0
  %197 = vmatpush1.bf16.msra.mxu0 0
  %198 = vmatprep.subr.bf16.mxu0 0
  %199 = vmatpush1.bf16.msra.mxu0 0
  %200 = vmatprep.subr.bf16.mxu0 0
  %201 = vmatpush1.bf16.msra.mxu0 0
  %202 = vmatprep.subr.bf16.mxu0 0
  %203 = vmatpush1.bf16.msra.mxu0 0
  %204 = vmatprep.subr.bf16.mxu0 0
  %205 = vmatpush1.bf16.msra.mxu0 0
  %206 = vmatprep.subr.bf16.mxu0 0
  %207 = vmatpush1.bf16.msra.mxu0 0
  %208 = vmatprep.mubr.bf16.mxu0 0
  %209 = vmatmul.mubr.bf16.gmra.mrb[0].mxu0 %v112
  %v210 = vpop.f32.mrb[0].mxu0
  %v211 = vadd.f32 0.0, %v210
  %v212 = vpop.f32.mrb[0].mxu0
  %v213 = vpop.f32.mrb[0].mxu0
  %v214 = vadd.f32 0.0, %v213
  %v215 = vpop.f32.mrb[0].mxu0
  %216 = vmatprep.mubr.bf16.mxu0 0
  %217 = vmatmul.mubr.bf16.gmra.mrb[0].mxu0 %v113
  %v218 = vpop.f32.mrb[0].mxu0
  %v219 = vadd.f32 0.0, %v218
  %v220 = vpop.f32.mrb[0].mxu0
  %v221 = vpop.f32.mrb[0].mxu0
  %v222 = vadd.f32 0.0, %v221
  %v223 = vpop.f32.mrb[0].mxu0
  %224 = vmatprep.mubr.bf16.mxu0 0
  %225 = vmatmul.mubr.bf16.gmra.mrb[0].mxu0 %v114
  %v226 = vpop.f32.mrb[0].mxu0
  %v227 = vadd.f32 0.0, %v226
  %v228 = vpop.f32.mrb[0].mxu0
  %v229 = vpop.f32.mrb[0].mxu0
  %v230 = vadd.f32 0.0, %v229
  %v231 = vpop.f32.mrb[0].mxu0
  %232 = vmatprep.mubr.bf16.mxu0 0
  %233 = vmatmul.mubr.bf16.gmra.mrb[0].mxu0 %v115
  %v234 = vpop.f32.mrb[0].mxu0
  %v235 = vadd.f32 0.0, %v234
  %v236 = vpop.f32.mrb[0].mxu0
  %v237 = vpop.f32.mrb[0].mxu0
  %v238 = vadd.f32 0.0, %v237
  %v239 = vpop.f32.mrb[0].mxu0
  %240 = vmatprep.mubr.bf16.mxu0 0
  %241 = vmatmul.mubr.bf16.gmra.mrb[0].mxu0 %v116
  %v242 = vpop.f32.mrb[0].mxu0
  %v243 = vadd.f32 0.0, %v242
  %v244 = vpop.f32.mrb[0].mxu0
  %v245 = vpop.f32.mrb[0].mxu0
  %v246 = vadd.f32 0.0, %v245
  %v247 = vpop.f32.mrb[0].mxu0
  %248 = vmatprep.mubr.bf16.mxu0 0
  %249 = vmatmul.mubr.bf16.gmra.mrb[0].mxu0 %v117
  %v250 = vpop.f32.mrb[0].mxu0
  %v251 = vadd.f32 0.0, %v250
  %v252 = vpop.f32.mrb[0].mxu0
  %v253 = vpop.f32.mrb[0].mxu0
  %v254 = vadd.f32 0.0, %v253
  %v255 = vpop.f32.mrb[0].mxu0
  %256 = vmatprep.mubr.bf16.mxu0 0
  %257 = vmatmul.mubr.bf16.gmra.mrb[0].mxu0 %v118
  %v258 = vpop.f32.mrb[0].mxu0
  %v259 = vadd.f32 0.0, %v258
  %v260 = vpop.f32.mrb[0].mxu0
  %v261 = vpop.f32.mrb[0].mxu0
  %v262 = vadd.f32 0.0, %v261
  %v263 = vpop.f32.mrb[0].mxu0
  %264 = vmatprep.mubr.bf16.mxu0 0
  %265 = vmatmul.mubr.bf16.gmra.mrb[0].mxu0 %v119
  %v266 = vpop.f32.mrb[0].mxu0
  %v267 = vadd.f32 0.0, %v266
  %v268 = vpop.f32.mrb[0].mxu0
  %v269 = vpop.f32.mrb[0].mxu0
  %v270 = vadd.f32 0.0, %v269
  %v271 = vpop.f32.mrb[0].mxu0
  %272 = vdwg.mxu0
  %v273 = vadd.f32 %v32, %v211
  %v274 = vadd.f32 %v33, %v214
  %v275 = vadd.f32 %v34, %v219
  %v276 = vadd.f32 %v35, %v222
  %v277 = vadd.f32 %v36, %v227
  %v278 = vadd.f32 %v37, %v230
  %v279 = vadd.f32 %v38, %v235
  %v280 = vadd.f32 %v39, %v238
  %v281 = vadd.f32 %v40, %v243
  %v282 = vadd.f32 %v41, %v246
  %v283 = vadd.f32 %v42, %v251
  %v284 = vadd.f32 %v43, %v254
  %v285 = vadd.f32 %v44, %v259
  %v286 = vadd.f32 %v45, %v262
  %v287 = vadd.f32 %v46, %v267
  %v288 = vadd.f32 %v47, %v270
  %289 = vst [vmem:[#allocation2] sm:$0xff] %v273
  %290 = vst [vmem:[#allocation2 + $0x8] sm:$0xff] %v274
  %291 = vst [vmem:[#allocation2 + $0x10] sm:$0xff] %v275
  %292 = vst [vmem:[#allocation2 + $0x18] sm:$0xff] %v276
  %293 = vst [vmem:[#allocation2 + $0x20] sm:$0xff] %v277
  %294 = vst [vmem:[#allocation2 + $0x28] sm:$0xff] %v278
  %295 = vst [vmem:[#allocation2 + $0x30] sm:$0xff] %v279
  %296 = vst [vmem:[#allocation2 + $0x38] sm:$0xff] %v280
  %297 = vst [vmem:[#allocation2 + $0x40] sm:$0xff] %v281
  %298 = vst [vmem:[#allocation2 + $0x48] sm:$0xff] %v282
  %299 = vst [vmem:[#allocation2 + $0x50] sm:$0xff] %v283
  %300 = vst [vmem:[#allocation2 + $0x58] sm:$0xff] %v284
  %301 = vst [vmem:[#allocation2 + $0x60] sm:$0xff] %v285
  %302 = vst [vmem:[#allocation2 + $0x68] sm:$0xff] %v286
  %303 = vst [vmem:[#allocation2 + $0x70] sm:$0xff] %v287
  %304 = vst [vmem:[#allocation2 + $0x78] sm:$0xff] %v288
  // Predicated region
  $region14: #{gcn_forward_pallas.4} parent=0 // pred_check
    %p305 = pneg %p12
  $region15: #{gcn_forward_pallas.4} parent=0 // pred_check_branch
    %307 = sbr.rel (%p305) target = $region17
  $region16: #{gcn_forward_pallas.4} parent=0 // pred_region
    %v308 = vld [vmem:[#allocation2] sm:$0xff]
    %v309 = vld [vmem:[#allocation2 + $0x8] sm:$0xff]
    %v310 = vld [vmem:[#allocation2 + $0x10] sm:$0xff]
    %v311 = vld [vmem:[#allocation2 + $0x18] sm:$0xff]
    %v312 = vld [vmem:[#allocation2 + $0x20] sm:$0xff]
    %v313 = vld [vmem:[#allocation2 + $0x28] sm:$0xff]
    %v314 = vld [vmem:[#allocation2 + $0x30] sm:$0xff]
    %v315 = vld [vmem:[#allocation2 + $0x38] sm:$0xff]
    %v316 = vld [vmem:[#allocation2 + $0x40] sm:$0xff]
    %v317 = vld [vmem:[#allocation2 + $0x48] sm:$0xff]
    %v318 = vld [vmem:[#allocation2 + $0x50] sm:$0xff]
    %v319 = vld [vmem:[#allocation2 + $0x58] sm:$0xff]
    %v320 = vld [vmem:[#allocation2 + $0x60] sm:$0xff]
    %v321 = vld [vmem:[#allocation2 + $0x68] sm:$0xff]
    %v322 = vld [vmem:[#allocation2 + $0x70] sm:$0xff]
    %v323 = vld [vmem:[#allocation2 + $0x78] sm:$0xff]
    %v324 = vpack.c.bf16 %v309, %v308
    %v325 = vpack.c.bf16 %v311, %v310
    %v326 = vpack.c.bf16 %v313, %v312
    %v327 = vpack.c.bf16 %v315, %v314
    %v328 = vpack.c.bf16 %v317, %v316
    %v329 = vpack.c.bf16 %v319, %v318
    %v330 = vpack.c.bf16 %v321, %v320
    %v331 = vpack.c.bf16 %v323, %v322
    %v340 = vunpack.c.l.b16 %v324
    %v341 = vunpack.c.h.b16 %v324
    %v342 = vunpack.c.l.b16 %v325
    %v343 = vunpack.c.h.b16 %v325
    %v344 = vunpack.c.l.b16 %v326
    %v345 = vunpack.c.h.b16 %v326
    %v346 = vunpack.c.l.b16 %v327
    %v347 = vunpack.c.h.b16 %v327
    %v348 = vunpack.c.l.b16 %v328
    %v349 = vunpack.c.h.b16 %v328
    %v350 = vunpack.c.l.b16 %v329
    %v351 = vunpack.c.h.b16 %v329
    %v352 = vunpack.c.l.b16 %v330
    %v353 = vunpack.c.h.b16 %v330
    %v354 = vunpack.c.l.b16 %v331
    %v355 = vunpack.c.h.b16 %v331
    %v356 = vpack.c.b16 %v340, %v340
    %v357 = vpack.c.b16 %v341, %v341
    %v358 = vpack.c.b16 %v342, %v342
    %v359 = vpack.c.b16 %v343, %v343
    %v360 = vpack.c.b16 %v344, %v344
    %v361 = vpack.c.b16 %v345, %v345
    %v362 = vpack.c.b16 %v346, %v346
    %v363 = vpack.c.b16 %v347, %v347
    %v364 = vpack.c.b16 %v348, %v348
    %v365 = vpack.c.b16 %v349, %v349
    %v366 = vpack.c.b16 %v350, %v350
    %v367 = vpack.c.b16 %v351, %v351
    %v368 = vpack.c.b16 %v352, %v352
    %v369 = vpack.c.b16 %v353, %v353
    %v370 = vpack.c.b16 %v354, %v354
    %v371 = vpack.c.b16 %v355, %v355
    %388 = vst [vmem:[%s2] sm:$0xf] %v356
    %389 = vst [vmem:[%s2 + $0x4] sm:$0xf] %v357
    %390 = vst [vmem:[%s2 + $0x8] sm:$0xf] %v358
    %391 = vst [vmem:[%s2 + $0xc] sm:$0xf] %v359
    %392 = vst [vmem:[%s2 + $0x10] sm:$0xf] %v360
    %393 = vst [vmem:[%s2 + $0x14] sm:$0xf] %v361
    %394 = vst [vmem:[%s2 + $0x18] sm:$0xf] %v362
    %395 = vst [vmem:[%s2 + $0x1c] sm:$0xf] %v363
    %396 = vst [vmem:[%s2 + $0x20] sm:$0xf] %v364
    %397 = vst [vmem:[%s2 + $0x24] sm:$0xf] %v365
    %398 = vst [vmem:[%s2 + $0x28] sm:$0xf] %v366
    %399 = vst [vmem:[%s2 + $0x2c] sm:$0xf] %v367
    %400 = vst [vmem:[%s2 + $0x30] sm:$0xf] %v368
    %401 = vst [vmem:[%s2 + $0x34] sm:$0xf] %v369
    %402 = vst [vmem:[%s2 + $0x38] sm:$0xf] %v370
    %403 = vst [vmem:[%s2 + $0x3c] sm:$0xf] %v371
  $region17: #{gcn_forward_pallas.4} parent=0 // pred_fallthru
    _
  // Predicated region
  $region18: #{gcn_forward_pallas.4} parent=0 // pred_check
    _
  $region19: #{gcn_forward_pallas.4} parent=0 // pred_check_branch
    %405 = sbr.rel (0) target = $region21
  $region20: #{gcn_forward_pallas.4} parent=0 // pred_region
    _
  $region21: #{gcn_forward_pallas.4} parent=0 // pred_fallthru
    _
  // Predicated region
  $region22: #{gcn_forward_pallas.4} parent=0 // pred_check
    _
  $region23: #{gcn_forward_pallas.4} parent=0 // pred_check_branch
    %407 = sbr.rel (0) target = $region25
  $region24: #{gcn_forward_pallas.4} parent=0 // pred_region
    _
  $region25: #{gcn_forward_pallas.4} parent=0 // pred_fallthru
    _

</llo_original>
